<compile_context>
chip_gen: v5e
topology: v5e:2x2
jax: 0.10.0
libtpu: 0.0.40
codegen_flags: <defaults>
</compile_context>

<pallas_src>
import functools

import jax
import jax.numpy as jnp
from jax.experimental import pallas as pl
from jax.experimental.pallas import tpu as pltpu


def _exch_kernel(spin_pad_ref, geo_pad_ref, A_ref, e_ref, *, scale):
    """6-neighbour exchange stencil on halo-padded inputs.

    spin_pad_ref: (3, Xp, Yp, Zp) f32, 1-cell halo on every spatial face.
    geo_pad_ref:  (Xp, Yp, Zp)    f32, same halo convention.
    A_ref:        (nx, ny, nz)    f32 exchange constant field.
    e_ref:        (nx, ny, nz)    f32 output energy density.
    scale:        python float, -1.0 / dx**2 (folded at trace time).
    """
    _, Xp, Yp, Zp = spin_pad_ref.shape

    # interior / shifted windows (all static slices -> plain vector loads)
    cx, cy, cz = slice(1, Xp - 1), slice(1, Yp - 1), slice(1, Zp - 1)
    lx, hx = slice(0, Xp - 2), slice(2, Xp)
    ly, hy = slice(0, Yp - 2), slice(2, Yp)
    lz, hz = slice(0, Zp - 2), slice(2, Zp)

    # Geometry mask of the six neighbours, interior-sized (nx, ny, nz).
    g_xm = geo_pad_ref[lx, cy, cz]
    g_xp = geo_pad_ref[hx, cy, cz]
    g_ym = geo_pad_ref[cx, ly, cz]
    g_yp = geo_pad_ref[cx, hy, cz]
    g_zm = geo_pad_ref[cx, cy, lz]
    g_zp = geo_pad_ref[cx, cy, hz]
    gsum = g_xm + g_xp + g_ym + g_yp + g_zm + g_zp          # shared across C

    # Interior spin (re-used as the "spin" in the final contraction, so the
    # unpadded spin never needs to be DMA'd separately).
    x_c = spin_pad_ref[:, cx, cy, cz]                        # (3, nx, ny, nz)

    # sum_n spin(neigh) * geo(neigh), per component.
    sxg = (spin_pad_ref[:, lx, cy, cz] * g_xm[None]
           + spin_pad_ref[:, hx, cy, cz] * g_xp[None]
           + spin_pad_ref[:, cx, ly, cz] * g_ym[None]
           + spin_pad_ref[:, cx, hy, cz] * g_yp[None]
           + spin_pad_ref[:, cx, cy, lz] * g_zm[None]
           + spin_pad_ref[:, cx, cy, hz] * g_zp[None])

    # f_c = sum_n (x_n - x_c) * g_n  ==  sum_n x_n*g_n - x_c * gsum
    f = sxg - x_c * gsum[None]                               # (3, nx, ny, nz)

    # Contract components on the VPU, then one scalar-field scale by -A/dx^2.
    s = jnp.sum(f * x_c, axis=0)                             # (nx, ny, nz)
    e_ref[...] = s * (A_ref[...] * scale)


def _halo_pad(a, spatial_axis_offset, pbc):
    """1-cell halo per spatial face: wrap for periodic axes, zeros for open ones."""
    for k, ax_name in enumerate('xyz'):
        axis = spatial_axis_offset + k
        pad_width = [(0, 0)] * a.ndim
        pad_width[axis] = (1, 1)
        mode = 'wrap' if ax_name in pbc else 'constant'
        a = jnp.pad(a, pad_width, mode=mode)
    return a


def exch_forward(spin, geo, Ms, A, dx, pbc):
    """Pallas equivalent of Exch.forward(spin, geo, Ms).  Ms is unused, exactly
    as in the PyTorch module's forward."""
    del Ms  # unused in the reference forward

    spin = spin.astype(jnp.float32)
    geo = geo.astype(jnp.float32)
    A = A.astype(jnp.float32)

    # Glue: wrap-halo on periodic axes reproduces torch.roll wraparound on the
    # unpadded dim; zero-halo on open axes reproduces F.pad(...,'constant',0)
    # followed by the crop.  Keep them straight — mixing them changes physics.
    spin_pad = _halo_pad(spin, 1, pbc)      # (3, nx+2, ny+2, nz+2)
    geo_pad = _halo_pad(geo, 0, pbc)        # (nx+2, ny+2, nz+2)

    nx, ny, nz = spin.shape[1:]
    scale = -1.0 / (dx * dx)                # fold -A*dx*f / dx^3 -> -A/dx^2
    kernel = functools.partial(_exch_kernel, scale=scale)
    vmem = pltpu.MemorySpace.VMEM

    return pl.pallas_call(
        kernel,
        out_shape=jax.ShapeDtypeStruct((nx, ny, nz), jnp.float32),
        in_specs=[pl.BlockSpec(memory_space=vmem)] * 3,
        out_specs=pl.BlockSpec(memory_space=vmem),
    )(spin_pad, geo_pad, A)


def _exch_reference(spin, geo, A, dx, pbc):
    """Pure-JAX transcription of the PyTorch forward, for correctness checking."""
    px = 0 if 'x' in pbc else 1
    py = 0 if 'y' in pbc else 1
    pz = 0 if 'z' in pbc else 1
    x = jnp.pad(spin, ((0, 0), (px, px), (py, py), (pz, pz)))
    g = jnp.pad(geo, ((px, px), (py, py), (pz, pz)))
    f = jnp.zeros_like(x)
    for i in range(3):
        for s in (1, -1):
            f = f + (jnp.roll(x, s, axis=i + 1) - x) * jnp.roll(g, s, axis=i)[None]
    Xp, Yp, Zp = x.shape[1], x.shape[2], x.shape[3]
    f = f[:, px:Xp - px, py:Yp - py, pz:Zp - pz]
    f = -A[None] * dx * f
    E = jnp.sum(f * spin, axis=0)
    return E / (dx ** 3)


if __name__ == "__main__":
    key = jax.random.PRNGKey(0)
    k_spin, k_geo = jax.random.split(key)

    # Z last and = 128 -> lane-dense vector work and unmasked stores.
    nx, ny, nz = 4, 8, 128
    dx = 1e-9
    A_const = 1.3e-11
    pbc = "x"  # periodic along x, open (zero) boundaries along y and z

    # Unit-norm spin field, shape (3, nx, ny, nz)
    spin = jax.random.normal(k_spin, (3, nx, ny, nz), dtype=jnp.float32)
    spin = spin / jnp.linalg.norm(spin, axis=0, keepdims=True)

    # Geometry mask with some vacuum cells, shape (nx, ny, nz)
    geo = (jax.random.uniform(k_geo, (nx, ny, nz)) > 0.2).astype(jnp.float32)
    spin = spin * geo[None]

    # Saturation magnetisation (unused by the forward, kept for signature parity)
    Ms = jnp.full((nx, ny, nz), 8.0e5, dtype=jnp.float32)

    # Buffer A = init_scalar(A_const, shape): constant broadcast to the geometry shape
    A = jnp.full((nx, ny, nz), A_const, dtype=jnp.float32)

    E = exch_forward(spin, geo, Ms, A, dx, pbc)
    E = jax.block_until_ready(E)

    E_ref = _exch_reference(spin, geo, A, dx, pbc)
    tol = 1e-4 * float(jnp.max(jnp.abs(E_ref))) + 1e-6
    if not bool(jnp.allclose(E, E_ref, rtol=1e-4, atol=tol)):
        err = float(jnp.max(jnp.abs(E - E_ref)))
        raise AssertionError(
            f"Pallas Exch kernel does not match reference (max |diff| = {err})")

    print("KERNEL_OK")
</pallas_src>

<mosaic_0001>
module attributes {stable_mosaic.version = 11 : i64} {
  func.func @_exch_kernel(%arg0: memref<3x6x10x130xf32, #tpu.memory_space<vmem>>, %arg1: memref<6x10x130xf32, #tpu.memory_space<vmem>>, %arg2: memref<4x8x128xf32, #tpu.memory_space<vmem>>, %arg3: memref<4x8x128xf32, #tpu.memory_space<vmem>>) attributes {dimension_semantics = [], scalar_prefetch = 0 : i64, scratch_operands = 0 : i64, tpu.core_type = #tpu.core_type<tc>} {
    %c0 = arith.constant 0 : index
    %c1 = arith.constant 1 : index
    %c1_0 = arith.constant 1 : index
    %0 = vector.load %arg1[%c0, %c1, %c1_0] : memref<6x10x130xf32, #tpu.memory_space<vmem>>, vector<4x8x128xf32>
    %c2 = arith.constant 2 : index
    %c1_1 = arith.constant 1 : index
    %c1_2 = arith.constant 1 : index
    %1 = vector.load %arg1[%c2, %c1_1, %c1_2] : memref<6x10x130xf32, #tpu.memory_space<vmem>>, vector<4x8x128xf32>
    %c1_3 = arith.constant 1 : index
    %c0_4 = arith.constant 0 : index
    %c1_5 = arith.constant 1 : index
    %2 = vector.load %arg1[%c1_3, %c0_4, %c1_5] : memref<6x10x130xf32, #tpu.memory_space<vmem>>, vector<4x8x128xf32>
    %c1_6 = arith.constant 1 : index
    %c2_7 = arith.constant 2 : index
    %c1_8 = arith.constant 1 : index
    %3 = vector.load %arg1[%c1_6, %c2_7, %c1_8] : memref<6x10x130xf32, #tpu.memory_space<vmem>>, vector<4x8x128xf32>
    %c1_9 = arith.constant 1 : index
    %c1_10 = arith.constant 1 : index
    %c0_11 = arith.constant 0 : index
    %4 = vector.load %arg1[%c1_9, %c1_10, %c0_11] : memref<6x10x130xf32, #tpu.memory_space<vmem>>, vector<4x8x128xf32>
    %c1_12 = arith.constant 1 : index
    %c1_13 = arith.constant 1 : index
    %c2_14 = arith.constant 2 : index
    %5 = vector.load %arg1[%c1_12, %c1_13, %c2_14] : memref<6x10x130xf32, #tpu.memory_space<vmem>>, vector<4x8x128xf32>
    %6 = arith.addf %0, %1 : vector<4x8x128xf32>
    %7 = arith.addf %6, %2 : vector<4x8x128xf32>
    %8 = arith.addf %7, %3 : vector<4x8x128xf32>
    %9 = arith.addf %8, %4 : vector<4x8x128xf32>
    %10 = arith.addf %9, %5 : vector<4x8x128xf32>
    %c0_15 = arith.constant 0 : index
    %c1_16 = arith.constant 1 : index
    %c1_17 = arith.constant 1 : index
    %c1_18 = arith.constant 1 : index
    %11 = vector.load %arg0[%c0_15, %c1_16, %c1_17, %c1_18] : memref<3x6x10x130xf32, #tpu.memory_space<vmem>>, vector<3x4x8x128xf32>
    %c0_19 = arith.constant 0 : index
    %c0_20 = arith.constant 0 : index
    %c1_21 = arith.constant 1 : index
    %c1_22 = arith.constant 1 : index
    %12 = vector.load %arg0[%c0_19, %c0_20, %c1_21, %c1_22] : memref<3x6x10x130xf32, #tpu.memory_space<vmem>>, vector<3x4x8x128xf32>
    %13 = vector.shape_cast %0 : vector<4x8x128xf32> to vector<1x4x8x128xf32>
    %14 = vector.broadcast %13 : vector<1x4x8x128xf32> to vector<3x4x8x128xf32>
    %15 = arith.mulf %12, %14 : vector<3x4x8x128xf32>
    %c0_23 = arith.constant 0 : index
    %c2_24 = arith.constant 2 : index
    %c1_25 = arith.constant 1 : index
    %c1_26 = arith.constant 1 : index
    %16 = vector.load %arg0[%c0_23, %c2_24, %c1_25, %c1_26] : memref<3x6x10x130xf32, #tpu.memory_space<vmem>>, vector<3x4x8x128xf32>
    %17 = vector.shape_cast %1 : vector<4x8x128xf32> to vector<1x4x8x128xf32>
    %18 = vector.broadcast %17 : vector<1x4x8x128xf32> to vector<3x4x8x128xf32>
    %19 = arith.mulf %16, %18 : vector<3x4x8x128xf32>
    %20 = arith.addf %15, %19 : vector<3x4x8x128xf32>
    %c0_27 = arith.constant 0 : index
    %c1_28 = arith.constant 1 : index
    %c0_29 = arith.constant 0 : index
    %c1_30 = arith.constant 1 : index
    %21 = vector.load %arg0[%c0_27, %c1_28, %c0_29, %c1_30] : memref<3x6x10x130xf32, #tpu.memory_space<vmem>>, vector<3x4x8x128xf32>
    %22 = vector.shape_cast %2 : vector<4x8x128xf32> to vector<1x4x8x128xf32>
    %23 = vector.broadcast %22 : vector<1x4x8x128xf32> to vector<3x4x8x128xf32>
    %24 = arith.mulf %21, %23 : vector<3x4x8x128xf32>
    %25 = arith.addf %20, %24 : vector<3x4x8x128xf32>
    %c0_31 = arith.constant 0 : index
    %c1_32 = arith.constant 1 : index
    %c2_33 = arith.constant 2 : index
    %c1_34 = arith.constant 1 : index
    %26 = vector.load %arg0[%c0_31, %c1_32, %c2_33, %c1_34] : memref<3x6x10x130xf32, #tpu.memory_space<vmem>>, vector<3x4x8x128xf32>
    %27 = vector.shape_cast %3 : vector<4x8x128xf32> to vector<1x4x8x128xf32>
    %28 = vector.broadcast %27 : vector<1x4x8x128xf32> to vector<3x4x8x128xf32>
    %29 = arith.mulf %26, %28 : vector<3x4x8x128xf32>
    %30 = arith.addf %25, %29 : vector<3x4x8x128xf32>
    %c0_35 = arith.constant 0 : index
    %c1_36 = arith.constant 1 : index
    %c1_37 = arith.constant 1 : index
    %c0_38 = arith.constant 0 : index
    %31 = vector.load %arg0[%c0_35, %c1_36, %c1_37, %c0_38] : memref<3x6x10x130xf32, #tpu.memory_space<vmem>>, vector<3x4x8x128xf32>
    %32 = vector.shape_cast %4 : vector<4x8x128xf32> to vector<1x4x8x128xf32>
    %33 = vector.broadcast %32 : vector<1x4x8x128xf32> to vector<3x4x8x128xf32>
    %34 = arith.mulf %31, %33 : vector<3x4x8x128xf32>
    %35 = arith.addf %30, %34 : vector<3x4x8x128xf32>
    %c0_39 = arith.constant 0 : index
    %c1_40 = arith.constant 1 : index
    %c1_41 = arith.constant 1 : index
    %c2_42 = arith.constant 2 : index
    %36 = vector.load %arg0[%c0_39, %c1_40, %c1_41, %c2_42] : memref<3x6x10x130xf32, #tpu.memory_space<vmem>>, vector<3x4x8x128xf32>
    %37 = vector.shape_cast %5 : vector<4x8x128xf32> to vector<1x4x8x128xf32>
    %38 = vector.broadcast %37 : vector<1x4x8x128xf32> to vector<3x4x8x128xf32>
    %39 = arith.mulf %36, %38 : vector<3x4x8x128xf32>
    %40 = arith.addf %35, %39 : vector<3x4x8x128xf32>
    %41 = vector.shape_cast %10 : vector<4x8x128xf32> to vector<1x4x8x128xf32>
    %42 = vector.broadcast %41 : vector<1x4x8x128xf32> to vector<3x4x8x128xf32>
    %43 = arith.mulf %11, %42 : vector<3x4x8x128xf32>
    %44 = arith.subf %40, %43 : vector<3x4x8x128xf32>
    %45 = arith.mulf %44, %11 : vector<3x4x8x128xf32>
    %cst = arith.constant dense<0.000000e+00> : vector<4x8x128xf32>
    %46 = vector.multi_reduction <add>, %45, %cst [0] : vector<3x4x8x128xf32> to vector<4x8x128xf32>
    %c0_43 = arith.constant 0 : index
    %c0_44 = arith.constant 0 : index
    %c0_45 = arith.constant 0 : index
    %47 = vector.load %arg2[%c0_43, %c0_44, %c0_45] : memref<4x8x128xf32, #tpu.memory_space<vmem>>, vector<4x8x128xf32>
    %cst_46 = arith.constant -9.99999984E+17 : f32
    %48 = vector.broadcast %cst_46 : f32 to vector<4x8x128xf32>
    %49 = arith.mulf %47, %48 : vector<4x8x128xf32>
    %50 = arith.mulf %46, %49 : vector<4x8x128xf32>
    %c0_47 = arith.constant 0 : index
    %c0_48 = arith.constant 0 : index
    %c0_49 = arith.constant 0 : index
    %51 = vector.load %arg3[%c0_47, %c0_48, %c0_49] : memref<4x8x128xf32, #tpu.memory_space<vmem>>, vector<4x8x128xf32>
    tpu.vector_store %arg3[%c0_47, %c0_48, %c0_49], %50 {strides = array<i32>} : memref<4x8x128xf32, #tpu.memory_space<vmem>>, vector<4x8x128xf32>,
    return
  }
}

</mosaic_0001>

<llo_original>
// kernel: tpu_custom_call.1
$region0: #{tpu_custom_call.1}
  #allocation0 [shape = 'u32[]', space=smem, size = 0x4, offset = 0x4, fixed_abs, tag = 'smem constant byte address 0x4 - core index']
  #allocation1 [shape = 'u32[72,128]{1,0:T(1,128)}', space=vmem, size = 0x9000, scoped, tag = 'internal scratch']
  %s0 = inlined_call_operand.vmem [shape: f32[3,6,10,130], index: 0, kind: input, shape index: {}]
  %s1 = inlined_call_operand.vmem [shape: f32[6,10,130], index: 1, kind: input, shape index: {}]
  %s2 = inlined_call_operand.vmem [shape: f32[4,8,128], index: 2, kind: input, shape index: {}]
  %s3 = inlined_call_operand.hbm [shape: f32[4,8,128], index: 3, kind: output, shape index: {}]
  %s4 = sld [smem:[#allocation0]]
  $region22: #{tpu_custom_call.1} parent=0
    _
  %s6 = ssub.s32 1, %s4
  %s7 = scalar_select 0, %s6, %s4
  $region1: #{tpu_custom_call.1} parent=0
    #allocation2 [shape = 'u8[16384]{0}', space=vmem, size = 0x4000, scoped, tag = 'output window, operand 0, single buffered']
    #allocation3 [shape = 's32[1]{0}', space=sflag, size = 0x4, scoped, tag = 'scoped memory for tpu_custom_call.1']
    %8 = vsyncpa [#allocation3], 0
    // Predicated region
    $region2: #{tpu_custom_call.1} parent=1 // pred_check
      _
    $region3: #{tpu_custom_call.1} parent=1 // pred_check_branch
      %10 = sbr.rel (0) target = $region5
    $region4: #{tpu_custom_call.1} parent=1 // pred_region
      _
    $region5: #{tpu_custom_call.1} parent=1 // pred_fallthru
      _
    // Predicated region
    $region6: #{tpu_custom_call.1} parent=1 // pred_check
      _
    $region7: #{tpu_custom_call.1} parent=1 // pred_check_branch
      %12 = sbr.rel (0) target = $region9
    $region8: #{tpu_custom_call.1} parent=1 // pred_region
      _
    $region9: #{tpu_custom_call.1} parent=1 // pred_fallthru
      _
    // Predicated region
    $region10: #{tpu_custom_call.1} parent=1 // pred_check
      _
    $region11: #{tpu_custom_call.1} parent=1 // pred_check_branch
      %14 = sbr.rel (0) target = $region13
    $region12: #{tpu_custom_call.1} parent=1 // pred_region
      _
    $region13: #{tpu_custom_call.1} parent=1 // pred_fallthru
      _
    %v15 = vld [vmem:[%s1] sm:$0xfe]
    %v16 = vld [vmem:[%s1 + $0x8] sm:$0xfe]
    %v17 = vld [vmem:[%s1 + $0x10] sm:$0x1]
    %v18 = vld [vmem:[%s1 + $0x18] sm:$0x1]
    %v19 = vld [vmem:[%s1 + $0x20] sm:$0xfe]
    %v20 = vld [vmem:[%s1 + $0x28] sm:$0xfe]
    %v21 = vld [vmem:[%s1 + $0x30] sm:$0x1]
    %v22 = vld [vmem:[%s1 + $0x38] sm:$0x1]
    %v23 = vld [vmem:[%s1 + $0x40] sm:$0xfe]
    %v24 = vld [vmem:[%s1 + $0x48] sm:$0xfe]
    %v25 = vld [vmem:[%s1 + $0x50] sm:$0x1]
    %v26 = vld [vmem:[%s1 + $0x58] sm:$0x1]
    %v27 = vld [vmem:[%s1 + $0x60] sm:$0xfe]
    %v28 = vld [vmem:[%s1 + $0x68] sm:$0xfe]
    %v29 = vld [vmem:[%s1 + $0x70] sm:$0x1]
    %v30 = vld [vmem:[%s1 + $0x78] sm:$0x1]
    %s31 = scalar_lea.vmem %s1, 64
    %v32 = vld [vmem:[%s31] sm:$0xfe]
    %v33 = vld [vmem:[%s31 + $0x8] sm:$0xfe]
    %v34 = vld [vmem:[%s31 + $0x10] sm:$0x1]
    %v35 = vld [vmem:[%s31 + $0x18] sm:$0x1]
    %v36 = vld [vmem:[%s31 + $0x20] sm:$0xfe]
    %v37 = vld [vmem:[%s31 + $0x28] sm:$0xfe]
    %v38 = vld [vmem:[%s31 + $0x30] sm:$0x1]
    %v39 = vld [vmem:[%s31 + $0x38] sm:$0x1]
    %v40 = vld [vmem:[%s31 + $0x40] sm:$0xfe]
    %v41 = vld [vmem:[%s31 + $0x48] sm:$0xfe]
    %v42 = vld [vmem:[%s31 + $0x50] sm:$0x1]
    %v43 = vld [vmem:[%s31 + $0x58] sm:$0x1]
    %v44 = vld [vmem:[%s31 + $0x60] sm:$0xfe]
    %v45 = vld [vmem:[%s31 + $0x68] sm:$0xfe]
    %v46 = vld [vmem:[%s31 + $0x70] sm:$0x1]
    %v47 = vld [vmem:[%s31 + $0x78] sm:$0x1]
    %s48 = scalar_lea.vmem %s1, 32
    %v49 = vld [vmem:[%s48] sm:$0xff]
    %v50 = vld [vmem:[%s48 + $0x8] sm:$0xff]
    %v51 = vld [vmem:[%s48 + $0x20] sm:$0xff]
    %v52 = vld [vmem:[%s48 + $0x28] sm:$0xff]
    %v53 = vld [vmem:[%s48 + $0x40] sm:$0xff]
    %v54 = vld [vmem:[%s48 + $0x48] sm:$0xff]
    %v55 = vld [vmem:[%s48 + $0x60] sm:$0xff]
    %v56 = vld [vmem:[%s48 + $0x68] sm:$0xff]
    %v57 = vld [vmem:[%s48] sm:$0xfc]
    %v58 = vld [vmem:[%s48 + $0x8] sm:$0xfc]
    %v59 = vld [vmem:[%s48 + $0x10] sm:$0x3]
    %v60 = vld [vmem:[%s48 + $0x18] sm:$0x3]
    %v61 = vld [vmem:[%s48 + $0x20] sm:$0xfc]
    %v62 = vld [vmem:[%s48 + $0x28] sm:$0xfc]
    %v63 = vld [vmem:[%s48 + $0x30] sm:$0x3]
    %v64 = vld [vmem:[%s48 + $0x38] sm:$0x3]
    %v65 = vld [vmem:[%s48 + $0x40] sm:$0xfc]
    %v66 = vld [vmem:[%s48 + $0x48] sm:$0xfc]
    %v67 = vld [vmem:[%s48 + $0x50] sm:$0x3]
    %v68 = vld [vmem:[%s48 + $0x58] sm:$0x3]
    %v69 = vld [vmem:[%s48 + $0x60] sm:$0xfc]
    %v70 = vld [vmem:[%s48 + $0x68] sm:$0xfc]
    %v71 = vld [vmem:[%s48 + $0x70] sm:$0x3]
    %v72 = vld [vmem:[%s48 + $0x78] sm:$0x3]
    %v73 = vld [vmem:[%s48] sm:$0xfe]
    %v74 = vld [vmem:[%s48 + $0x10] sm:$0x1]
    %v75 = vld [vmem:[%s48 + $0x20] sm:$0xfe]
    %v76 = vld [vmem:[%s48 + $0x30] sm:$0x1]
    %v77 = vld [vmem:[%s48 + $0x40] sm:$0xfe]
    %v78 = vld [vmem:[%s48 + $0x50] sm:$0x1]
    %v79 = vld [vmem:[%s48 + $0x60] sm:$0xfe]
    %v80 = vld [vmem:[%s48 + $0x70] sm:$0x1]
    %v81 = vld [vmem:[%s48 + $0x8] sm:$0xfe]
    %v82 = vld [vmem:[%s48 + $0x18] sm:$0x1]
    %v83 = vld [vmem:[%s48 + $0x28] sm:$0xfe]
    %v84 = vld [vmem:[%s48 + $0x38] sm:$0x1]
    %v85 = vld [vmem:[%s48 + $0x48] sm:$0xfe]
    %v86 = vld [vmem:[%s48 + $0x58] sm:$0x1]
    %v87 = vld [vmem:[%s48 + $0x68] sm:$0xfe]
    %v88 = vld [vmem:[%s48 + $0x78] sm:$0x1]
    %v89 = vadd.f32 %v15, %v32
    %v90 = vadd.f32 %v16, %v33
    %v91 = vadd.f32 %v17, %v34
    %v92 = vadd.f32 %v18, %v35
    %v93 = vadd.f32 %v19, %v36
    %v94 = vadd.f32 %v20, %v37
    %v95 = vadd.f32 %v21, %v38
    %v96 = vadd.f32 %v22, %v39
    %v97 = vadd.f32 %v23, %v40
    %v98 = vadd.f32 %v24, %v41
    %v99 = vadd.f32 %v25, %v42
    %v100 = vadd.f32 %v26, %v43
    %v101 = vadd.f32 %v27, %v44
    %v102 = vadd.f32 %v28, %v45
    %v103 = vadd.f32 %v29, %v46
    %v104 = vadd.f32 %v30, %v47
    %v113 = vrot.slane %v49, 7
    %v114 = vrot.slane %v50, 7
    %v115 = vrot.slane %v51, 7
    %v116 = vrot.slane %v52, 7
    %v117 = vrot.slane %v53, 7
    %v118 = vrot.slane %v54, 7
    %v119 = vrot.slane %v55, 7
    %v120 = vrot.slane %v56, 7
    %v129 = vadd.f32 %v89, %v113
    %v130 = vadd.f32 %v90, %v114
    %v131 = vadd.f32 %v91, %v113
    %v132 = vadd.f32 %v92, %v114
    %v133 = vadd.f32 %v93, %v115
    %v134 = vadd.f32 %v94, %v116
    %v135 = vadd.f32 %v95, %v115
    %v136 = vadd.f32 %v96, %v116
    %v137 = vadd.f32 %v97, %v117
    %v138 = vadd.f32 %v98, %v118
    %v139 = vadd.f32 %v99, %v117
    %v140 = vadd.f32 %v100, %v118
    %v141 = vadd.f32 %v101, %v119
    %v142 = vadd.f32 %v102, %v120
    %v143 = vadd.f32 %v103, %v119
    %v144 = vadd.f32 %v104, %v120
    %vm161 = vcmask 1046528
    %v162 = vrot.slane %v57, 1
    %v163 = vrot.slane %v59, 1
    %v164 = vsel %vm161, %v162, %v163
    %v165 = vrot.slane %v58, 1
    %v166 = vrot.slane %v60, 1
    %v167 = vsel %vm161, %v165, %v166
    %v168 = vrot.slane %v61, 1
    %v169 = vrot.slane %v63, 1
    %v170 = vsel %vm161, %v168, %v169
    %v171 = vrot.slane %v62, 1
    %v172 = vrot.slane %v64, 1
    %v173 = vsel %vm161, %v171, %v172
    %v174 = vrot.slane %v65, 1
    %v175 = vrot.slane %v67, 1
    %v176 = vsel %vm161, %v174, %v175
    %v177 = vrot.slane %v66, 1
    %v178 = vrot.slane %v68, 1
    %v179 = vsel %vm161, %v177, %v178
    %v180 = vrot.slane %v69, 1
    %v181 = vrot.slane %v71, 1
    %v182 = vsel %vm161, %v180, %v181
    %v183 = vrot.slane %v70, 1
    %v184 = vrot.slane %v72, 1
    %v185 = vsel %vm161, %v183, %v184
    %v202 = vadd.f32 %v129, %v164
    %v203 = vadd.f32 %v130, %v167
    %v204 = vadd.f32 %v131, %v163
    %v205 = vadd.f32 %v132, %v166
    %v206 = vadd.f32 %v133, %v170
    %v207 = vadd.f32 %v134, %v173
    %v208 = vadd.f32 %v135, %v169
    %v209 = vadd.f32 %v136, %v172
    %v210 = vadd.f32 %v137, %v176
    %v211 = vadd.f32 %v138, %v179
    %v212 = vadd.f32 %v139, %v175
    %v213 = vadd.f32 %v140, %v178
    %v214 = vadd.f32 %v141, %v182
    %v215 = vadd.f32 %v142, %v185
    %v216 = vadd.f32 %v143, %v181
    %v217 = vadd.f32 %v144, %v184
    %226 = vrot.lane.b32.xlu0 %v73, 1
    %v227 = vpop.permute.xlu0 %226
    %228 = vrot.lane.b32.xlu0 %v74, 1
    %v229 = vpop.permute.xlu0 %228
    %230 = vrot.lane.b32.xlu0 %v75, 1
    %v231 = vpop.permute.xlu0 %230
    %232 = vrot.lane.b32.xlu0 %v76, 1
    %v233 = vpop.permute.xlu0 %232
    %234 = vrot.lane.b32.xlu0 %v77, 1
    %v235 = vpop.permute.xlu0 %234
    %236 = vrot.lane.b32.xlu0 %v78, 1
    %v237 = vpop.permute.xlu0 %236
    %238 = vrot.lane.b32.xlu0 %v79, 1
    %v239 = vpop.permute.xlu0 %238
    %240 = vrot.lane.b32.xlu0 %v80, 1
    %v241 = vpop.permute.xlu0 %240
    %v250 = vadd.f32 %v202, %v227
    %v251 = vadd.f32 %v203, %v227
    %v252 = vadd.f32 %v204, %v229
    %v253 = vadd.f32 %v205, %v229
    %v254 = vadd.f32 %v206, %v231
    %v255 = vadd.f32 %v207, %v231
    %v256 = vadd.f32 %v208, %v233
    %v257 = vadd.f32 %v209, %v233
    %v258 = vadd.f32 %v210, %v235
    %v259 = vadd.f32 %v211, %v235
    %v260 = vadd.f32 %v212, %v237
    %v261 = vadd.f32 %v213, %v237
    %v262 = vadd.f32 %v214, %v239
    %v263 = vadd.f32 %v215, %v239
    %v264 = vadd.f32 %v216, %v241
    %v265 = vadd.f32 %v217, %v241
    %274 = vrot.lane.b32.xlu0 %v73, 127
    %v275 = vpop.permute.xlu0 %274
    %276 = vrot.lane.b32.xlu0 %v81, 127
    %v277 = vpop.permute.xlu0 %276
    %278 = vrot.lane.b32.xlu0 %v74, 127
    %v279 = vpop.permute.xlu0 %278
    %280 = vrot.lane.b32.xlu0 %v82, 127
    %v281 = vpop.permute.xlu0 %280
    %282 = vrot.lane.b32.xlu0 %v75, 127
    %v283 = vpop.permute.xlu0 %282
    %284 = vrot.lane.b32.xlu0 %v83, 127
    %v285 = vpop.permute.xlu0 %284
    %286 = vrot.lane.b32.xlu0 %v76, 127
    %v287 = vpop.permute.xlu0 %286
    %288 = vrot.lane.b32.xlu0 %v84, 127
    %v289 = vpop.permute.xlu0 %288
    %290 = vrot.lane.b32.xlu0 %v77, 127
    %v291 = vpop.permute.xlu0 %290
    %292 = vrot.lane.b32.xlu0 %v85, 127
    %v293 = vpop.permute.xlu0 %292
    %294 = vrot.lane.b32.xlu0 %v78, 127
    %v295 = vpop.permute.xlu0 %294
    %296 = vrot.lane.b32.xlu0 %v86, 127
    %v297 = vpop.permute.xlu0 %296
    %298 = vrot.lane.b32.xlu0 %v79, 127
    %v299 = vpop.permute.xlu0 %298
    %300 = vrot.lane.b32.xlu0 %v87, 127
    %v301 = vpop.permute.xlu0 %300
    %302 = vrot.lane.b32.xlu0 %v80, 127
    %v303 = vpop.permute.xlu0 %302
    %304 = vrot.lane.b32.xlu0 %v88, 127
    %v305 = vpop.permute.xlu0 %304
    %vm306 = vcmask 1039360
    %v307 = vsel %vm306, %v275, %v277
    %v308 = vsel %vm306, %v279, %v281
    %v309 = vsel %vm306, %v283, %v285
    %v310 = vsel %vm306, %v287, %v289
    %v311 = vsel %vm306, %v291, %v293
    %v312 = vsel %vm306, %v295, %v297
    %v313 = vsel %vm306, %v299, %v301
    %v314 = vsel %vm306, %v303, %v305
    %v331 = vadd.f32 %v250, %v307
    %v332 = vadd.f32 %v251, %v277
    %v333 = vadd.f32 %v252, %v308
    %v334 = vadd.f32 %v253, %v281
    %v335 = vadd.f32 %v254, %v309
    %v336 = vadd.f32 %v255, %v285
    %v337 = vadd.f32 %v256, %v310
    %v338 = vadd.f32 %v257, %v289
    %v339 = vadd.f32 %v258, %v311
    %v340 = vadd.f32 %v259, %v293
    %v341 = vadd.f32 %v260, %v312
    %v342 = vadd.f32 %v261, %v297
    %v343 = vadd.f32 %v262, %v313
    %v344 = vadd.f32 %v263, %v301
    %v345 = vadd.f32 %v264, %v314
    %v346 = vadd.f32 %v265, %v305
    %s347 = scalar_lea.vmem %s0, 32
    %v348 = vld [vmem:[%s347] sm:$0xfe]
    %v349 = vld [vmem:[%s347 + $0x8] sm:$0xfe]
    %v350 = vld [vmem:[%s347 + $0x10] sm:$0x1]
    %v351 = vld [vmem:[%s347 + $0x18] sm:$0x1]
    %v352 = vld [vmem:[%s347 + $0x20] sm:$0xfe]
    %v353 = vld [vmem:[%s347 + $0x28] sm:$0xfe]
    %v354 = vld [vmem:[%s347 + $0x30] sm:$0x1]
    %v355 = vld [vmem:[%s347 + $0x38] sm:$0x1]
    %v356 = vld [vmem:[%s347 + $0x40] sm:$0xfe]
    %v357 = vld [vmem:[%s347 + $0x48] sm:$0xfe]
    %v358 = vld [vmem:[%s347 + $0x50] sm:$0x1]
    %v359 = vld [vmem:[%s347 + $0x58] sm:$0x1]
    %v360 = vld [vmem:[%s347 + $0x60] sm:$0xfe]
    %v361 = vld [vmem:[%s347 + $0x68] sm:$0xfe]
    %v362 = vld [vmem:[%s347 + $0x70] sm:$0x1]
    %v363 = vld [vmem:[%s347 + $0x78] sm:$0x1]
    %v364 = vld [vmem:[%s347 + $0xc0] sm:$0xfe]
    %v365 = vld [vmem:[%s347 + $0xc8] sm:$0xfe]
    %v366 = vld [vmem:[%s347 + $0xd0] sm:$0x1]
    %v367 = vld [vmem:[%s347 + $0xd8] sm:$0x1]
    %v368 = vld [vmem:[%s347 + $0xe0] sm:$0xfe]
    %v369 = vld [vmem:[%s347 + $0xe8] sm:$0xfe]
    %v370 = vld [vmem:[%s347 + $0xf0] sm:$0x1]
    %v371 = vld [vmem:[%s347 + $0xf8] sm:$0x1]
    %v372 = vld [vmem:[%s347 + $0x100] sm:$0xfe]
    %v373 = vld [vmem:[%s347 + $0x108] sm:$0xfe]
    %v374 = vld [vmem:[%s347 + $0x110] sm:$0x1]
    %v375 = vld [vmem:[%s347 + $0x118] sm:$0x1]
    %v376 = vld [vmem:[%s347 + $0x120] sm:$0xfe]
    %v377 = vld [vmem:[%s347 + $0x128] sm:$0xfe]
    %v378 = vld [vmem:[%s347 + $0x130] sm:$0x1]
    %v379 = vld [vmem:[%s347 + $0x138] sm:$0x1]
    %v380 = vld [vmem:[%s347 + $0x180] sm:$0xfe]
    %v381 = vld [vmem:[%s347 + $0x188] sm:$0xfe]
    %v382 = vld [vmem:[%s347 + $0x190] sm:$0x1]
    %v383 = vld [vmem:[%s347 + $0x198] sm:$0x1]
    %v384 = vld [vmem:[%s347 + $0x1a0] sm:$0xfe]
    %v385 = vld [vmem:[%s347 + $0x1a8] sm:$0xfe]
    %v386 = vld [vmem:[%s347 + $0x1b0] sm:$0x1]
    %v387 = vld [vmem:[%s347 + $0x1b8] sm:$0x1]
    %v388 = vld [vmem:[%s347 + $0x1c0] sm:$0xfe]
    %v389 = vld [vmem:[%s347 + $0x1c8] sm:$0xfe]
    %v390 = vld [vmem:[%s347 + $0x1d0] sm:$0x1]
    %v391 = vld [vmem:[%s347 + $0x1d8] sm:$0x1]
    %v392 = vld [vmem:[%s347 + $0x1e0] sm:$0xfe]
    %v393 = vld [vmem:[%s347 + $0x1e8] sm:$0xfe]
    %v394 = vld [vmem:[%s347 + $0x1f0] sm:$0x1]
    %v395 = vld [vmem:[%s347 + $0x1f8] sm:$0x1]
    %v396 = vld [vmem:[%s0] sm:$0xfe]
    %v397 = vld [vmem:[%s0 + $0x8] sm:$0xfe]
    %v398 = vld [vmem:[%s0 + $0x10] sm:$0x1]
    %v399 = vld [vmem:[%s0 + $0x18] sm:$0x1]
    %v400 = vld [vmem:[%s0 + $0x20] sm:$0xfe]
    %v401 = vld [vmem:[%s0 + $0x28] sm:$0xfe]
    %v402 = vld [vmem:[%s0 + $0x30] sm:$0x1]
    %v403 = vld [vmem:[%s0 + $0x38] sm:$0x1]
    %v404 = vld [vmem:[%s0 + $0x40] sm:$0xfe]
    %v405 = vld [vmem:[%s0 + $0x48] sm:$0xfe]
    %v406 = vld [vmem:[%s0 + $0x50] sm:$0x1]
    %v407 = vld [vmem:[%s0 + $0x58] sm:$0x1]
    %v408 = vld [vmem:[%s0 + $0x60] sm:$0xfe]
    %v409 = vld [vmem:[%s0 + $0x68] sm:$0xfe]
    %v410 = vld [vmem:[%s0 + $0x70] sm:$0x1]
    %v411 = vld [vmem:[%s0 + $0x78] sm:$0x1]
    %v412 = vld [vmem:[%s0 + $0xc0] sm:$0xfe]
    %v413 = vld [vmem:[%s0 + $0xc8] sm:$0xfe]
    %v414 = vld [vmem:[%s0 + $0xd0] sm:$0x1]
    %v415 = vld [vmem:[%s0 + $0xd8] sm:$0x1]
    %v416 = vld [vmem:[%s0 + $0xe0] sm:$0xfe]
    %v417 = vld [vmem:[%s0 + $0xe8] sm:$0xfe]
    %v418 = vld [vmem:[%s0 + $0xf0] sm:$0x1]
    %v419 = vld [vmem:[%s0 + $0xf8] sm:$0x1]
    %v420 = vld [vmem:[%s0 + $0x100] sm:$0xfe]
    %v421 = vld [vmem:[%s0 + $0x108] sm:$0xfe]
    %v422 = vld [vmem:[%s0 + $0x110] sm:$0x1]
    %v423 = vld [vmem:[%s0 + $0x118] sm:$0x1]
    %v424 = vld [vmem:[%s0 + $0x120] sm:$0xfe]
    %v425 = vld [vmem:[%s0 + $0x128] sm:$0xfe]
    %v426 = vld [vmem:[%s0 + $0x130] sm:$0x1]
    %v427 = vld [vmem:[%s0 + $0x138] sm:$0x1]
    %v428 = vld [vmem:[%s0 + $0x180] sm:$0xfe]
    %v429 = vld [vmem:[%s0 + $0x188] sm:$0xfe]
    %v430 = vld [vmem:[%s0 + $0x190] sm:$0x1]
    %v431 = vld [vmem:[%s0 + $0x198] sm:$0x1]
    %v432 = vld [vmem:[%s0 + $0x1a0] sm:$0xfe]
    %v433 = vld [vmem:[%s0 + $0x1a8] sm:$0xfe]
    %v434 = vld [vmem:[%s0 + $0x1b0] sm:$0x1]
    %v435 = vld [vmem:[%s0 + $0x1b8] sm:$0x1]
    %v436 = vld [vmem:[%s0 + $0x1c0] sm:$0xfe]
    %v437 = vld [vmem:[%s0 + $0x1c8] sm:$0xfe]
    %v438 = vld [vmem:[%s0 + $0x1d0] sm:$0x1]
    %v439 = vld [vmem:[%s0 + $0x1d8] sm:$0x1]
    %v440 = vld [vmem:[%s0 + $0x1e0] sm:$0xfe]
    %v441 = vld [vmem:[%s0 + $0x1e8] sm:$0xfe]
    %v442 = vld [vmem:[%s0 + $0x1f0] sm:$0x1]
    %v443 = vld [vmem:[%s0 + $0x1f8] sm:$0x1]
    %v444 = vmul.f32 %v396, %v15
    %v445 = vmul.f32 %v397, %v16
    %v446 = vmul.f32 %v398, %v17
    %v447 = vmul.f32 %v399, %v18
    %v448 = vmul.f32 %v400, %v19
    %v449 = vmul.f32 %v401, %v20
    %v450 = vmul.f32 %v402, %v21
    %v451 = vmul.f32 %v403, %v22
    %v452 = vmul.f32 %v404, %v23
    %v453 = vmul.f32 %v405, %v24
    %v454 = vmul.f32 %v406, %v25
    %v455 = vmul.f32 %v407, %v26
    %v456 = vmul.f32 %v408, %v27
    %v457 = vmul.f32 %v409, %v28
    %v458 = vmul.f32 %v410, %v29
    %v459 = vmul.f32 %v411, %v30
    %v460 = vmul.f32 %v412, %v15
    %v461 = vmul.f32 %v413, %v16
    %v462 = vmul.f32 %v414, %v17
    %v463 = vmul.f32 %v415, %v18
    %v464 = vmul.f32 %v416, %v19
    %v465 = vmul.f32 %v417, %v20
    %v466 = vmul.f32 %v418, %v21
    %v467 = vmul.f32 %v419, %v22
    %v468 = vmul.f32 %v420, %v23
    %v469 = vmul.f32 %v421, %v24
    %v470 = vmul.f32 %v422, %v25
    %v471 = vmul.f32 %v423, %v26
    %v472 = vmul.f32 %v424, %v27
    %v473 = vmul.f32 %v425, %v28
    %v474 = vmul.f32 %v426, %v29
    %v475 = vmul.f32 %v427, %v30
    %v476 = vmul.f32 %v428, %v15
    %v477 = vmul.f32 %v429, %v16
    %v478 = vmul.f32 %v430, %v17
    %v479 = vmul.f32 %v431, %v18
    %v480 = vmul.f32 %v432, %v19
    %v481 = vmul.f32 %v433, %v20
    %v482 = vmul.f32 %v434, %v21
    %v483 = vmul.f32 %v435, %v22
    %v484 = vmul.f32 %v436, %v23
    %v485 = vmul.f32 %v437, %v24
    %v486 = vmul.f32 %v438, %v25
    %v487 = vmul.f32 %v439, %v26
    %v488 = vmul.f32 %v440, %v27
    %v489 = vmul.f32 %v441, %v28
    %v490 = vmul.f32 %v442, %v29
    %v491 = vmul.f32 %v443, %v30
    %s492 = scalar_lea.vmem %s0, 64
    %v493 = vld [vmem:[%s492] sm:$0xfe]
    %v494 = vld [vmem:[%s492 + $0x8] sm:$0xfe]
    %v495 = vld [vmem:[%s492 + $0x10] sm:$0x1]
    %v496 = vld [vmem:[%s492 + $0x18] sm:$0x1]
    %v497 = vld [vmem:[%s492 + $0x20] sm:$0xfe]
    %v498 = vld [vmem:[%s492 + $0x28] sm:$0xfe]
    %v499 = vld [vmem:[%s492 + $0x30] sm:$0x1]
    %v500 = vld [vmem:[%s492 + $0x38] sm:$0x1]
    %v501 = vld [vmem:[%s492 + $0x40] sm:$0xfe]
    %v502 = vld [vmem:[%s492 + $0x48] sm:$0xfe]
    %v503 = vld [vmem:[%s492 + $0x50] sm:$0x1]
    %v504 = vld [vmem:[%s492 + $0x58] sm:$0x1]
    %v505 = vld [vmem:[%s492 + $0x60] sm:$0xfe]
    %v506 = vld [vmem:[%s492 + $0x68] sm:$0xfe]
    %v507 = vld [vmem:[%s492 + $0x70] sm:$0x1]
    %v508 = vld [vmem:[%s492 + $0x78] sm:$0x1]
    %v509 = vld [vmem:[%s492 + $0xc0] sm:$0xfe]
    %v510 = vld [vmem:[%s492 + $0xc8] sm:$0xfe]
    %v511 = vld [vmem:[%s492 + $0xd0] sm:$0x1]
    %v512 = vld [vmem:[%s492 + $0xd8] sm:$0x1]
    %v513 = vld [vmem:[%s492 + $0xe0] sm:$0xfe]
    %v514 = vld [vmem:[%s492 + $0xe8] sm:$0xfe]
    %v515 = vld [vmem:[%s492 + $0xf0] sm:$0x1]
    %v516 = vld [vmem:[%s492 + $0xf8] sm:$0x1]
    %v517 = vld [vmem:[%s492 + $0x100] sm:$0xfe]
    %v518 = vld [vmem:[%s492 + $0x108] sm:$0xfe]
    %v519 = vld [vmem:[%s492 + $0x110] sm:$0x1]
    %v520 = vld [vmem:[%s492 + $0x118] sm:$0x1]
    %v521 = vld [vmem:[%s492 + $0x120] sm:$0xfe]
    %v522 = vld [vmem:[%s492 + $0x128] sm:$0xfe]
    %v523 = vld [vmem:[%s492 + $0x130] sm:$0x1]
    %v524 = vld [vmem:[%s492 + $0x138] sm:$0x1]
    %v525 = vld [vmem:[%s492 + $0x180] sm:$0xfe]
    %v526 = vld [vmem:[%s492 + $0x188] sm:$0xfe]
    %v527 = vld [vmem:[%s492 + $0x190] sm:$0x1]
    %v528 = vld [vmem:[%s492 + $0x198] sm:$0x1]
    %v529 = vld [vmem:[%s492 + $0x1a0] sm:$0xfe]
    %v530 = vld [vmem:[%s492 + $0x1a8] sm:$0xfe]
    %v531 = vld [vmem:[%s492 + $0x1b0] sm:$0x1]
    %v532 = vld [vmem:[%s492 + $0x1b8] sm:$0x1]
    %v533 = vld [vmem:[%s492 + $0x1c0] sm:$0xfe]
    %v534 = vld [vmem:[%s492 + $0x1c8] sm:$0xfe]
    %v535 = vld [vmem:[%s492 + $0x1d0] sm:$0x1]
    %v536 = vld [vmem:[%s492 + $0x1d8] sm:$0x1]
    %v537 = vld [vmem:[%s492 + $0x1e0] sm:$0xfe]
    %v538 = vld [vmem:[%s492 + $0x1e8] sm:$0xfe]
    %v539 = vld [vmem:[%s492 + $0x1f0] sm:$0x1]
    %v540 = vld [vmem:[%s492 + $0x1f8] sm:$0x1]
    %v541 = vmul.f32 %v493, %v32
    %v542 = vmul.f32 %v494, %v33
    %v543 = vmul.f32 %v495, %v34
    %v544 = vmul.f32 %v496, %v35
    %v545 = vmul.f32 %v497, %v36
    %v546 = vmul.f32 %v498, %v37
    %v547 = vmul.f32 %v499, %v38
    %v548 = vmul.f32 %v500, %v39
    %v549 = vmul.f32 %v501, %v40
    %v550 = vmul.f32 %v502, %v41
    %v551 = vmul.f32 %v503, %v42
    %v552 = vmul.f32 %v504, %v43
    %v553 = vmul.f32 %v505, %v44
    %v554 = vmul.f32 %v506, %v45
    %v555 = vmul.f32 %v507, %v46
    %v556 = vmul.f32 %v508, %v47
    %v557 = vmul.f32 %v509, %v32
    %v558 = vmul.f32 %v510, %v33
    %v559 = vmul.f32 %v511, %v34
    %v560 = vmul.f32 %v512, %v35
    %v561 = vmul.f32 %v513, %v36
    %v562 = vmul.f32 %v514, %v37
    %v563 = vmul.f32 %v515, %v38
    %v564 = vmul.f32 %v516, %v39
    %v565 = vmul.f32 %v517, %v40
    %v566 = vmul.f32 %v518, %v41
    %v567 = vmul.f32 %v519, %v42
    %v568 = vmul.f32 %v520, %v43
    %v569 = vmul.f32 %v521, %v44
    %v570 = vmul.f32 %v522, %v45
    %v571 = vmul.f32 %v523, %v46
    %v572 = vmul.f32 %v524, %v47
    %v573 = vmul.f32 %v525, %v32
    %v574 = vmul.f32 %v526, %v33
    %v575 = vmul.f32 %v527, %v34
    %v576 = vmul.f32 %v528, %v35
    %v577 = vmul.f32 %v529, %v36
    %v578 = vmul.f32 %v530, %v37
    %v579 = vmul.f32 %v531, %v38
    %v580 = vmul.f32 %v532, %v39
    %v581 = vmul.f32 %v533, %v40
    %v582 = vmul.f32 %v534, %v41
    %v583 = vmul.f32 %v535, %v42
    %v584 = vmul.f32 %v536, %v43
    %v585 = vmul.f32 %v537, %v44
    %v586 = vmul.f32 %v538, %v45
    %v587 = vmul.f32 %v539, %v46
    %v588 = vmul.f32 %v540, %v47
    %v589 = vadd.f32 %v444, %v541
    %v590 = vadd.f32 %v445, %v542
    %v591 = vadd.f32 %v446, %v543
    %v592 = vadd.f32 %v447, %v544
    %v593 = vadd.f32 %v448, %v545
    %v594 = vadd.f32 %v449, %v546
    %v595 = vadd.f32 %v450, %v547
    %v596 = vadd.f32 %v451, %v548
    %v597 = vadd.f32 %v452, %v549
    %v598 = vadd.f32 %v453, %v550
    %v599 = vadd.f32 %v454, %v551
    %v600 = vadd.f32 %v455, %v552
    %v601 = vadd.f32 %v456, %v553
    %v602 = vadd.f32 %v457, %v554
    %v603 = vadd.f32 %v458, %v555
    %v604 = vadd.f32 %v459, %v556
    %v605 = vadd.f32 %v460, %v557
    %v606 = vadd.f32 %v461, %v558
    %v607 = vadd.f32 %v462, %v559
    %v608 = vadd.f32 %v463, %v560
    %v609 = vadd.f32 %v464, %v561
    %v610 = vadd.f32 %v465, %v562
    %v611 = vadd.f32 %v466, %v563
    %v612 = vadd.f32 %v467, %v564
    %v613 = vadd.f32 %v468, %v565
    %v614 = vadd.f32 %v469, %v566
    %v615 = vadd.f32 %v470, %v567
    %v616 = vadd.f32 %v471, %v568
    %v617 = vadd.f32 %v472, %v569
    %v618 = vadd.f32 %v473, %v570
    %v619 = vadd.f32 %v474, %v571
    %v620 = vadd.f32 %v475, %v572
    %v621 = vadd.f32 %v476, %v573
    %v622 = vadd.f32 %v477, %v574
    %v623 = vadd.f32 %v478, %v575
    %v624 = vadd.f32 %v479, %v576
    %v625 = vadd.f32 %v480, %v577
    %v626 = vadd.f32 %v481, %v578
    %v627 = vadd.f32 %v482, %v579
    %v628 = vadd.f32 %v483, %v580
    %v629 = vadd.f32 %v484, %v581
    %v630 = vadd.f32 %v485, %v582
    %v631 = vadd.f32 %v486, %v583
    %v632 = vadd.f32 %v487, %v584
    %v633 = vadd.f32 %v488, %v585
    %v634 = vadd.f32 %v489, %v586
    %v635 = vadd.f32 %v490, %v587
    %v636 = vadd.f32 %v491, %v588
    %v637 = vld [vmem:[%s347] sm:$0xff]
    %v638 = vld [vmem:[%s347 + $0x8] sm:$0xff]
    %v639 = vld [vmem:[%s347 + $0x20] sm:$0xff]
    %v640 = vld [vmem:[%s347 + $0x28] sm:$0xff]
    %v641 = vld [vmem:[%s347 + $0x40] sm:$0xff]
    %v642 = vld [vmem:[%s347 + $0x48] sm:$0xff]
    %v643 = vld [vmem:[%s347 + $0x60] sm:$0xff]
    %v644 = vld [vmem:[%s347 + $0x68] sm:$0xff]
    %v645 = vld [vmem:[%s347 + $0xc0] sm:$0xff]
    %v646 = vld [vmem:[%s347 + $0xc8] sm:$0xff]
    %v647 = vld [vmem:[%s347 + $0xe0] sm:$0xff]
    %v648 = vld [vmem:[%s347 + $0xe8] sm:$0xff]
    %v649 = vld [vmem:[%s347 + $0x100] sm:$0xff]
    %v650 = vld [vmem:[%s347 + $0x108] sm:$0xff]
    %v651 = vld [vmem:[%s347 + $0x120] sm:$0xff]
    %v652 = vld [vmem:[%s347 + $0x128] sm:$0xff]
    %v653 = vld [vmem:[%s347 + $0x180] sm:$0xff]
    %v654 = vld [vmem:[%s347 + $0x188] sm:$0xff]
    %v655 = vld [vmem:[%s347 + $0x1a0] sm:$0xff]
    %v656 = vld [vmem:[%s347 + $0x1a8] sm:$0xff]
    %v657 = vld [vmem:[%s347 + $0x1c0] sm:$0xff]
    %v658 = vld [vmem:[%s347 + $0x1c8] sm:$0xff]
    %v659 = vld [vmem:[%s347 + $0x1e0] sm:$0xff]
    %v660 = vld [vmem:[%s347 + $0x1e8] sm:$0xff]
    %v661 = vmul.f32 %v637, %v49
    %v662 = vmul.f32 %v638, %v50
    %v663 = vmul.f32 %v639, %v51
    %v664 = vmul.f32 %v640, %v52
    %v665 = vmul.f32 %v641, %v53
    %v666 = vmul.f32 %v642, %v54
    %v667 = vmul.f32 %v643, %v55
    %v668 = vmul.f32 %v644, %v56
    %v669 = vmul.f32 %v645, %v49
    %v670 = vmul.f32 %v646, %v50
    %v671 = vmul.f32 %v647, %v51
    %v672 = vmul.f32 %v648, %v52
    %v673 = vmul.f32 %v649, %v53
    %v674 = vmul.f32 %v650, %v54
    %v675 = vmul.f32 %v651, %v55
    %v676 = vmul.f32 %v652, %v56
    %v677 = vmul.f32 %v653, %v49
    %v678 = vmul.f32 %v654, %v50
    %v679 = vmul.f32 %v655, %v51
    %v680 = vmul.f32 %v656, %v52
    %v681 = vmul.f32 %v657, %v53
    %v682 = vmul.f32 %v658, %v54
    %v683 = vmul.f32 %v659, %v55
    %v684 = vmul.f32 %v660, %v56
    %v709 = vrot.slane %v661, 7
    %v710 = vrot.slane %v662, 7
    %v711 = vrot.slane %v663, 7
    %v712 = vrot.slane %v664, 7
    %v713 = vrot.slane %v665, 7
    %v714 = vrot.slane %v666, 7
    %v715 = vrot.slane %v667, 7
    %v716 = vrot.slane %v668, 7
    %v717 = vrot.slane %v669, 7
    %v718 = vrot.slane %v670, 7
    %v719 = vrot.slane %v671, 7
    %v720 = vrot.slane %v672, 7
    %v721 = vrot.slane %v673, 7
    %v722 = vrot.slane %v674, 7
    %v723 = vrot.slane %v675, 7
    %v724 = vrot.slane %v676, 7
    %v725 = vrot.slane %v677, 7
    %v726 = vrot.slane %v678, 7
    %v727 = vrot.slane %v679, 7
    %v728 = vrot.slane %v680, 7
    %v729 = vrot.slane %v681, 7
    %v730 = vrot.slane %v682, 7
    %v731 = vrot.slane %v683, 7
    %v732 = vrot.slane %v684, 7
    %v757 = vadd.f32 %v589, %v709
    %v758 = vadd.f32 %v590, %v710
    %v759 = vadd.f32 %v591, %v709
    %v760 = vadd.f32 %v592, %v710
    %v761 = vadd.f32 %v593, %v711
    %v762 = vadd.f32 %v594, %v712
    %v763 = vadd.f32 %v595, %v711
    %v764 = vadd.f32 %v596, %v712
    %v765 = vadd.f32 %v597, %v713
    %v766 = vadd.f32 %v598, %v714
    %v767 = vadd.f32 %v599, %v713
    %v768 = vadd.f32 %v600, %v714
    %v769 = vadd.f32 %v601, %v715
    %v770 = vadd.f32 %v602, %v716
    %v771 = vadd.f32 %v603, %v715
    %v772 = vadd.f32 %v604, %v716
    %v773 = vadd.f32 %v605, %v717
    %v774 = vadd.f32 %v606, %v718
    %v775 = vadd.f32 %v607, %v717
    %v776 = vadd.f32 %v608, %v718
    %v777 = vadd.f32 %v609, %v719
    %v778 = vadd.f32 %v610, %v720
    %v779 = vadd.f32 %v611, %v719
    %v780 = vadd.f32 %v612, %v720
    %v781 = vadd.f32 %v613, %v721
    %v782 = vadd.f32 %v614, %v722
    %v783 = vadd.f32 %v615, %v721
    %v784 = vadd.f32 %v616, %v722
    %v785 = vadd.f32 %v617, %v723
    %v786 = vadd.f32 %v618, %v724
    %v787 = vadd.f32 %v619, %v723
    %v788 = vadd.f32 %v620, %v724
    %v789 = vadd.f32 %v621, %v725
    %v790 = vadd.f32 %v622, %v726
    %v791 = vadd.f32 %v623, %v725
    %v792 = vadd.f32 %v624, %v726
    %v793 = vadd.f32 %v625, %v727
    %v794 = vadd.f32 %v626, %v728
    %v795 = vadd.f32 %v627, %v727
    %v796 = vadd.f32 %v628, %v728
    %v797 = vadd.f32 %v629, %v729
    %v798 = vadd.f32 %v630, %v730
    %v799 = vadd.f32 %v631, %v729
    %v800 = vadd.f32 %v632, %v730
    %v801 = vadd.f32 %v633, %v731
    %v802 = vadd.f32 %v634, %v732
    %v803 = vadd.f32 %v635, %v731
    %v804 = vadd.f32 %v636, %v732
    %v805 = vld [vmem:[%s347] sm:$0xfc]
    %v806 = vld [vmem:[%s347 + $0x8] sm:$0xfc]
    %v807 = vld [vmem:[%s347 + $0x10] sm:$0x3]
    %v808 = vld [vmem:[%s347 + $0x18] sm:$0x3]
    %v809 = vld [vmem:[%s347 + $0x20] sm:$0xfc]
    %v810 = vld [vmem:[%s347 + $0x28] sm:$0xfc]
    %v811 = vld [vmem:[%s347 + $0x30] sm:$0x3]
    %v812 = vld [vmem:[%s347 + $0x38] sm:$0x3]
    %v813 = vld [vmem:[%s347 + $0x40] sm:$0xfc]
    %v814 = vld [vmem:[%s347 + $0x48] sm:$0xfc]
    %v815 = vld [vmem:[%s347 + $0x50] sm:$0x3]
    %v816 = vld [vmem:[%s347 + $0x58] sm:$0x3]
    %v817 = vld [vmem:[%s347 + $0x60] sm:$0xfc]
    %v818 = vld [vmem:[%s347 + $0x68] sm:$0xfc]
    %v819 = vld [vmem:[%s347 + $0x70] sm:$0x3]
    %v820 = vld [vmem:[%s347 + $0x78] sm:$0x3]
    %v821 = vld [vmem:[%s347 + $0xc0] sm:$0xfc]
    %v822 = vld [vmem:[%s347 + $0xc8] sm:$0xfc]
    %v823 = vld [vmem:[%s347 + $0xd0] sm:$0x3]
    %v824 = vld [vmem:[%s347 + $0xd8] sm:$0x3]
    %v825 = vld [vmem:[%s347 + $0xe0] sm:$0xfc]
    %v826 = vld [vmem:[%s347 + $0xe8] sm:$0xfc]
    %v827 = vld [vmem:[%s347 + $0xf0] sm:$0x3]
    %v828 = vld [vmem:[%s347 + $0xf8] sm:$0x3]
    %v829 = vld [vmem:[%s347 + $0x100] sm:$0xfc]
    %v830 = vld [vmem:[%s347 + $0x108] sm:$0xfc]
    %v831 = vld [vmem:[%s347 + $0x110] sm:$0x3]
    %v832 = vld [vmem:[%s347 + $0x118] sm:$0x3]
    %v833 = vld [vmem:[%s347 + $0x120] sm:$0xfc]
    %v834 = vld [vmem:[%s347 + $0x128] sm:$0xfc]
    %v835 = vld [vmem:[%s347 + $0x130] sm:$0x3]
    %v836 = vld [vmem:[%s347 + $0x138] sm:$0x3]
    %v837 = vld [vmem:[%s347 + $0x180] sm:$0xfc]
    %v838 = vld [vmem:[%s347 + $0x188] sm:$0xfc]
    %v839 = vld [vmem:[%s347 + $0x190] sm:$0x3]
    %v840 = vld [vmem:[%s347 + $0x198] sm:$0x3]
    %v841 = vld [vmem:[%s347 + $0x1a0] sm:$0xfc]
    %v842 = vld [vmem:[%s347 + $0x1a8] sm:$0xfc]
    %v843 = vld [vmem:[%s347 + $0x1b0] sm:$0x3]
    %v844 = vld [vmem:[%s347 + $0x1b8] sm:$0x3]
    %v845 = vld [vmem:[%s347 + $0x1c0] sm:$0xfc]
    %v846 = vld [vmem:[%s347 + $0x1c8] sm:$0xfc]
    %v847 = vld [vmem:[%s347 + $0x1d0] sm:$0x3]
    %v848 = vld [vmem:[%s347 + $0x1d8] sm:$0x3]
    %v849 = vld [vmem:[%s347 + $0x1e0] sm:$0xfc]
    %v850 = vld [vmem:[%s347 + $0x1e8] sm:$0xfc]
    %v851 = vld [vmem:[%s347 + $0x1f0] sm:$0x3]
    %v852 = vld [vmem:[%s347 + $0x1f8] sm:$0x3]
    %v853 = vmul.f32 %v805, %v57
    %v854 = vmul.f32 %v806, %v58
    %v855 = vmul.f32 %v807, %v59
    %v856 = vmul.f32 %v808, %v60
    %v857 = vmul.f32 %v809, %v61
    %v858 = vmul.f32 %v810, %v62
    %v859 = vmul.f32 %v811, %v63
    %v860 = vmul.f32 %v812, %v64
    %v861 = vmul.f32 %v813, %v65
    %v862 = vmul.f32 %v814, %v66
    %v863 = vmul.f32 %v815, %v67
    %v864 = vmul.f32 %v816, %v68
    %v865 = vmul.f32 %v817, %v69
    %v866 = vmul.f32 %v818, %v70
    %v867 = vmul.f32 %v819, %v71
    %v868 = vmul.f32 %v820, %v72
    %v869 = vmul.f32 %v821, %v57
    %v870 = vmul.f32 %v822, %v58
    %v871 = vmul.f32 %v823, %v59
    %v872 = vmul.f32 %v824, %v60
    %v873 = vmul.f32 %v825, %v61
    %v874 = vmul.f32 %v826, %v62
    %v875 = vmul.f32 %v827, %v63
    %v876 = vmul.f32 %v828, %v64
    %v877 = vmul.f32 %v829, %v65
    %v878 = vmul.f32 %v830, %v66
    %v879 = vmul.f32 %v831, %v67
    %v880 = vmul.f32 %v832, %v68
    %v881 = vmul.f32 %v833, %v69
    %v882 = vmul.f32 %v834, %v70
    %v883 = vmul.f32 %v835, %v71
    %v884 = vmul.f32 %v836, %v72
    %v885 = vmul.f32 %v837, %v57
    %v886 = vmul.f32 %v838, %v58
    %v887 = vmul.f32 %v839, %v59
    %v888 = vmul.f32 %v840, %v60
    %v889 = vmul.f32 %v841, %v61
    %v890 = vmul.f32 %v842, %v62
    %v891 = vmul.f32 %v843, %v63
    %v892 = vmul.f32 %v844, %v64
    %v893 = vmul.f32 %v845, %v65
    %v894 = vmul.f32 %v846, %v66
    %v895 = vmul.f32 %v847, %v67
    %v896 = vmul.f32 %v848, %v68
    %v897 = vmul.f32 %v849, %v69
    %v898 = vmul.f32 %v850, %v70
    %v899 = vmul.f32 %v851, %v71
    %v900 = vmul.f32 %v852, %v72
    %v949 = vrot.slane %v853, 1
    %v950 = vrot.slane %v855, 1
    %v951 = vsel %vm161, %v949, %v950
    %v952 = vrot.slane %v854, 1
    %v953 = vrot.slane %v856, 1
    %v954 = vsel %vm161, %v952, %v953
    %v955 = vrot.slane %v857, 1
    %v956 = vrot.slane %v859, 1
    %v957 = vsel %vm161, %v955, %v956
    %v958 = vrot.slane %v858, 1
    %v959 = vrot.slane %v860, 1
    %v960 = vsel %vm161, %v958, %v959
    %v961 = vrot.slane %v861, 1
    %v962 = vrot.slane %v863, 1
    %v963 = vsel %vm161, %v961, %v962
    %v964 = vrot.slane %v862, 1
    %v965 = vrot.slane %v864, 1
    %v966 = vsel %vm161, %v964, %v965
    %v967 = vrot.slane %v865, 1
    %v968 = vrot.slane %v867, 1
    %v969 = vsel %vm161, %v967, %v968
    %v970 = vrot.slane %v866, 1
    %v971 = vrot.slane %v868, 1
    %v972 = vsel %vm161, %v970, %v971
    %v973 = vrot.slane %v869, 1
    %v974 = vrot.slane %v871, 1
    %v975 = vsel %vm161, %v973, %v974
    %v976 = vrot.slane %v870, 1
    %v977 = vrot.slane %v872, 1
    %v978 = vsel %vm161, %v976, %v977
    %v979 = vrot.slane %v873, 1
    %v980 = vrot.slane %v875, 1
    %v981 = vsel %vm161, %v979, %v980
    %v982 = vrot.slane %v874, 1
    %v983 = vrot.slane %v876, 1
    %v984 = vsel %vm161, %v982, %v983
    %v985 = vrot.slane %v877, 1
    %v986 = vrot.slane %v879, 1
    %v987 = vsel %vm161, %v985, %v986
    %v988 = vrot.slane %v878, 1
    %v989 = vrot.slane %v880, 1
    %v990 = vsel %vm161, %v988, %v989
    %v991 = vrot.slane %v881, 1
    %v992 = vrot.slane %v883, 1
    %v993 = vsel %vm161, %v991, %v992
    %v994 = vrot.slane %v882, 1
    %v995 = vrot.slane %v884, 1
    %v996 = vsel %vm161, %v994, %v995
    %v997 = vrot.slane %v885, 1
    %v998 = vrot.slane %v887, 1
    %v999 = vsel %vm161, %v997, %v998
    %v1000 = vrot.slane %v886, 1
    %v1001 = vrot.slane %v888, 1
    %v1002 = vsel %vm161, %v1000, %v1001
    %v1003 = vrot.slane %v889, 1
    %v1004 = vrot.slane %v891, 1
    %v1005 = vsel %vm161, %v1003, %v1004
    %v1006 = vrot.slane %v890, 1
    %v1007 = vrot.slane %v892, 1
    %v1008 = vsel %vm161, %v1006, %v1007
    %v1009 = vrot.slane %v893, 1
    %v1010 = vrot.slane %v895, 1
    %v1011 = vsel %vm161, %v1009, %v1010
    %v1012 = vrot.slane %v894, 1
    %v1013 = vrot.slane %v896, 1
    %v1014 = vsel %vm161, %v1012, %v1013
    %v1015 = vrot.slane %v897, 1
    %v1016 = vrot.slane %v899, 1
    %v1017 = vsel %vm161, %v1015, %v1016
    %v1018 = vrot.slane %v898, 1
    %v1019 = vrot.slane %v900, 1
    %v1020 = vsel %vm161, %v1018, %v1019
    %v1069 = vadd.f32 %v757, %v951
    %v1070 = vadd.f32 %v758, %v954
    %v1071 = vadd.f32 %v759, %v950
    %v1072 = vadd.f32 %v760, %v953
    %v1073 = vadd.f32 %v761, %v957
    %v1074 = vadd.f32 %v762, %v960
    %v1075 = vadd.f32 %v763, %v956
    %v1076 = vadd.f32 %v764, %v959
    %v1077 = vadd.f32 %v765, %v963
    %v1078 = vadd.f32 %v766, %v966
    %v1079 = vadd.f32 %v767, %v962
    %v1080 = vadd.f32 %v768, %v965
    %v1081 = vadd.f32 %v769, %v969
    %v1082 = vadd.f32 %v770, %v972
    %v1083 = vadd.f32 %v771, %v968
    %v1084 = vadd.f32 %v772, %v971
    %v1085 = vadd.f32 %v773, %v975
    %v1086 = vadd.f32 %v774, %v978
    %v1087 = vadd.f32 %v775, %v974
    %v1088 = vadd.f32 %v776, %v977
    %v1089 = vadd.f32 %v777, %v981
    %v1090 = vadd.f32 %v778, %v984
    %v1091 = vadd.f32 %v779, %v980
    %v1092 = vadd.f32 %v780, %v983
    %v1093 = vadd.f32 %v781, %v987
    %v1094 = vadd.f32 %v782, %v990
    %v1095 = vadd.f32 %v783, %v986
    %v1096 = vadd.f32 %v784, %v989
    %v1097 = vadd.f32 %v785, %v993
    %v1098 = vadd.f32 %v786, %v996
    %v1099 = vadd.f32 %v787, %v992
    %v1100 = vadd.f32 %v788, %v995
    %v1101 = vadd.f32 %v789, %v999
    %v1102 = vadd.f32 %v790, %v1002
    %v1103 = vadd.f32 %v791, %v998
    %v1104 = vadd.f32 %v792, %v1001
    %v1105 = vadd.f32 %v793, %v1005
    %v1106 = vadd.f32 %v794, %v1008
    %v1107 = vadd.f32 %v795, %v1004
    %v1108 = vadd.f32 %v796, %v1007
    %v1109 = vadd.f32 %v797, %v1011
    %v1110 = vadd.f32 %v798, %v1014
    %v1111 = vadd.f32 %v799, %v1010
    %v1112 = vadd.f32 %v800, %v1013
    %v1113 = vadd.f32 %v801, %v1017
    %v1114 = vadd.f32 %v802, %v1020
    %v1115 = vadd.f32 %v803, %v1016
    %v1116 = vadd.f32 %v804, %v1019
    %v1117 = vmul.f32 %v348, %v73
    %v1118 = vmul.f32 %v350, %v74
    %v1119 = vmul.f32 %v352, %v75
    %v1120 = vmul.f32 %v354, %v76
    %v1121 = vmul.f32 %v356, %v77
    %v1122 = vmul.f32 %v358, %v78
    %v1123 = vmul.f32 %v360, %v79
    %v1124 = vmul.f32 %v362, %v80
    %v1125 = vmul.f32 %v364, %v73
    %v1126 = vmul.f32 %v366, %v74
    %v1127 = vmul.f32 %v368, %v75
    %v1128 = vmul.f32 %v370, %v76
    %v1129 = vmul.f32 %v372, %v77
    %v1130 = vmul.f32 %v374, %v78
    %v1131 = vmul.f32 %v376, %v79
    %v1132 = vmul.f32 %v378, %v80
    %v1133 = vmul.f32 %v380, %v73
    %v1134 = vmul.f32 %v382, %v74
    %v1135 = vmul.f32 %v384, %v75
    %v1136 = vmul.f32 %v386, %v76
    %v1137 = vmul.f32 %v388, %v77
    %v1138 = vmul.f32 %v390, %v78
    %v1139 = vmul.f32 %v392, %v79
    %v1140 = vmul.f32 %v394, %v80
    %1165 = vrot.lane.b32.xlu0 %v1117, 1
    %v1166 = vpop.permute.xlu0 %1165
    %1167 = vrot.lane.b32.xlu0 %v1118, 1
    %v1168 = vpop.permute.xlu0 %1167
    %1169 = vrot.lane.b32.xlu0 %v1119, 1
    %v1170 = vpop.permute.xlu0 %1169
    %1171 = vrot.lane.b32.xlu0 %v1120, 1
    %v1172 = vpop.permute.xlu0 %1171
    %1173 = vrot.lane.b32.xlu0 %v1121, 1
    %v1174 = vpop.permute.xlu0 %1173
    %1175 = vrot.lane.b32.xlu0 %v1122, 1
    %v1176 = vpop.permute.xlu0 %1175
    %1177 = vrot.lane.b32.xlu0 %v1123, 1
    %v1178 = vpop.permute.xlu0 %1177
    %1179 = vrot.lane.b32.xlu0 %v1124, 1
    %v1180 = vpop.permute.xlu0 %1179
    %1181 = vrot.lane.b32.xlu0 %v1125, 1
    %v1182 = vpop.permute.xlu0 %1181
    %1183 = vrot.lane.b32.xlu0 %v1126, 1
    %v1184 = vpop.permute.xlu0 %1183
    %1185 = vrot.lane.b32.xlu0 %v1127, 1
    %v1186 = vpop.permute.xlu0 %1185
    %1187 = vrot.lane.b32.xlu0 %v1128, 1
    %v1188 = vpop.permute.xlu0 %1187
    %1189 = vrot.lane.b32.xlu0 %v1129, 1
    %v1190 = vpop.permute.xlu0 %1189
    %1191 = vrot.lane.b32.xlu0 %v1130, 1
    %v1192 = vpop.permute.xlu0 %1191
    %1193 = vrot.lane.b32.xlu0 %v1131, 1
    %v1194 = vpop.permute.xlu0 %1193
    %1195 = vrot.lane.b32.xlu0 %v1132, 1
    %v1196 = vpop.permute.xlu0 %1195
    %1197 = vrot.lane.b32.xlu0 %v1133, 1
    %v1198 = vpop.permute.xlu0 %1197
    %1199 = vrot.lane.b32.xlu0 %v1134, 1
    %v1200 = vpop.permute.xlu0 %1199
    %1201 = vrot.lane.b32.xlu0 %v1135, 1
    %v1202 = vpop.permute.xlu0 %1201
    %1203 = vrot.lane.b32.xlu0 %v1136, 1
    %v1204 = vpop.permute.xlu0 %1203
    %1205 = vrot.lane.b32.xlu0 %v1137, 1
    %v1206 = vpop.permute.xlu0 %1205
    %1207 = vrot.lane.b32.xlu0 %v1138, 1
    %v1208 = vpop.permute.xlu0 %1207
    %1209 = vrot.lane.b32.xlu0 %v1139, 1
    %v1210 = vpop.permute.xlu0 %1209
    %1211 = vrot.lane.b32.xlu0 %v1140, 1
    %v1212 = vpop.permute.xlu0 %1211
    %v1237 = vadd.f32 %v1069, %v1166
    %v1238 = vadd.f32 %v1070, %v1166
    %v1239 = vadd.f32 %v1071, %v1168
    %v1240 = vadd.f32 %v1072, %v1168
    %v1241 = vadd.f32 %v1073, %v1170
    %v1242 = vadd.f32 %v1074, %v1170
    %v1243 = vadd.f32 %v1075, %v1172
    %v1244 = vadd.f32 %v1076, %v1172
    %v1245 = vadd.f32 %v1077, %v1174
    %v1246 = vadd.f32 %v1078, %v1174
    %v1247 = vadd.f32 %v1079, %v1176
    %v1248 = vadd.f32 %v1080, %v1176
    %v1249 = vadd.f32 %v1081, %v1178
    %v1250 = vadd.f32 %v1082, %v1178
    %v1251 = vadd.f32 %v1083, %v1180
    %v1252 = vadd.f32 %v1084, %v1180
    %v1253 = vadd.f32 %v1085, %v1182
    %v1254 = vadd.f32 %v1086, %v1182
    %v1255 = vadd.f32 %v1087, %v1184
    %v1256 = vadd.f32 %v1088, %v1184
    %v1257 = vadd.f32 %v1089, %v1186
    %v1258 = vadd.f32 %v1090, %v1186
    %v1259 = vadd.f32 %v1091, %v1188
    %v1260 = vadd.f32 %v1092, %v1188
    %v1261 = vadd.f32 %v1093, %v1190
    %v1262 = vadd.f32 %v1094, %v1190
    %v1263 = vadd.f32 %v1095, %v1192
    %v1264 = vadd.f32 %v1096, %v1192
    %v1265 = vadd.f32 %v1097, %v1194
    %v1266 = vadd.f32 %v1098, %v1194
    %v1267 = vadd.f32 %v1099, %v1196
    %v1268 = vadd.f32 %v1100, %v1196
    %v1269 = vadd.f32 %v1101, %v1198
    %v1270 = vadd.f32 %v1102, %v1198
    %v1271 = vadd.f32 %v1103, %v1200
    %v1272 = vadd.f32 %v1104, %v1200
    %v1273 = vadd.f32 %v1105, %v1202
    %v1274 = vadd.f32 %v1106, %v1202
    %v1275 = vadd.f32 %v1107, %v1204
    %v1276 = vadd.f32 %v1108, %v1204
    %v1277 = vadd.f32 %v1109, %v1206
    %v1278 = vadd.f32 %v1110, %v1206
    %v1279 = vadd.f32 %v1111, %v1208
    %v1280 = vadd.f32 %v1112, %v1208
    %v1281 = vadd.f32 %v1113, %v1210
    %v1282 = vadd.f32 %v1114, %v1210
    %v1283 = vadd.f32 %v1115, %v1212
    %v1284 = vadd.f32 %v1116, %v1212
    %v1285 = vmul.f32 %v349, %v81
    %v1286 = vmul.f32 %v351, %v82
    %v1287 = vmul.f32 %v353, %v83
    %v1288 = vmul.f32 %v355, %v84
    %v1289 = vmul.f32 %v357, %v85
    %v1290 = vmul.f32 %v359, %v86
    %v1291 = vmul.f32 %v361, %v87
    %v1292 = vmul.f32 %v363, %v88
    %v1293 = vmul.f32 %v365, %v81
    %v1294 = vmul.f32 %v367, %v82
    %v1295 = vmul.f32 %v369, %v83
    %v1296 = vmul.f32 %v371, %v84
    %v1297 = vmul.f32 %v373, %v85
    %v1298 = vmul.f32 %v375, %v86
    %v1299 = vmul.f32 %v377, %v87
    %v1300 = vmul.f32 %v379, %v88
    %v1301 = vmul.f32 %v381, %v81
    %v1302 = vmul.f32 %v383, %v82
    %v1303 = vmul.f32 %v385, %v83
    %v1304 = vmul.f32 %v387, %v84
    %v1305 = vmul.f32 %v389, %v85
    %v1306 = vmul.f32 %v391, %v86
    %v1307 = vmul.f32 %v393, %v87
    %v1308 = vmul.f32 %v395, %v88
    %1333 = vrot.lane.b32.xlu0 %v1117, 127
    %v1334 = vpop.permute.xlu0 %1333
    %1335 = vrot.lane.b32.xlu0 %v1285, 127
    %v1336 = vpop.permute.xlu0 %1335
    %1337 = vrot.lane.b32.xlu0 %v1118, 127
    %v1338 = vpop.permute.xlu0 %1337
    %1339 = vrot.lane.b32.xlu0 %v1286, 127
    %v1340 = vpop.permute.xlu0 %1339
    %1341 = vrot.lane.b32.xlu0 %v1119, 127
    %v1342 = vpop.permute.xlu0 %1341
    %1343 = vrot.lane.b32.xlu0 %v1287, 127
    %v1344 = vpop.permute.xlu0 %1343
    %1345 = vrot.lane.b32.xlu0 %v1120, 127
    %v1346 = vpop.permute.xlu0 %1345
    %1347 = vrot.lane.b32.xlu0 %v1288, 127
    %v1348 = vpop.permute.xlu0 %1347
    %1349 = vrot.lane.b32.xlu0 %v1121, 127
    %v1350 = vpop.permute.xlu0 %1349
    %1351 = vrot.lane.b32.xlu0 %v1289, 127
    %v1352 = vpop.permute.xlu0 %1351
    %1353 = vrot.lane.b32.xlu0 %v1122, 127
    %v1354 = vpop.permute.xlu0 %1353
    %1355 = vrot.lane.b32.xlu0 %v1290, 127
    %v1356 = vpop.permute.xlu0 %1355
    %1357 = vrot.lane.b32.xlu0 %v1123, 127
    %v1358 = vpop.permute.xlu0 %1357
    %1359 = vrot.lane.b32.xlu0 %v1291, 127
    %v1360 = vpop.permute.xlu0 %1359
    %1361 = vrot.lane.b32.xlu0 %v1124, 127
    %v1362 = vpop.permute.xlu0 %1361
    %1363 = vrot.lane.b32.xlu0 %v1292, 127
    %v1364 = vpop.permute.xlu0 %1363
    %1365 = vrot.lane.b32.xlu0 %v1125, 127
    %v1366 = vpop.permute.xlu0 %1365
    %1367 = vrot.lane.b32.xlu0 %v1293, 127
    %v1368 = vpop.permute.xlu0 %1367
    %1369 = vrot.lane.b32.xlu0 %v1126, 127
    %v1370 = vpop.permute.xlu0 %1369
    %1371 = vrot.lane.b32.xlu0 %v1294, 127
    %v1372 = vpop.permute.xlu0 %1371
    %1373 = vrot.lane.b32.xlu0 %v1127, 127
    %v1374 = vpop.permute.xlu0 %1373
    %1375 = vrot.lane.b32.xlu0 %v1295, 127
    %v1376 = vpop.permute.xlu0 %1375
    %1377 = vrot.lane.b32.xlu0 %v1128, 127
    %v1378 = vpop.permute.xlu0 %1377
    %1379 = vrot.lane.b32.xlu0 %v1296, 127
    %v1380 = vpop.permute.xlu0 %1379
    %1381 = vrot.lane.b32.xlu0 %v1129, 127
    %v1382 = vpop.permute.xlu0 %1381
    %1383 = vrot.lane.b32.xlu0 %v1297, 127
    %v1384 = vpop.permute.xlu0 %1383
    %1385 = vrot.lane.b32.xlu0 %v1130, 127
    %v1386 = vpop.permute.xlu0 %1385
    %1387 = vrot.lane.b32.xlu0 %v1298, 127
    %v1388 = vpop.permute.xlu0 %1387
    %1389 = vrot.lane.b32.xlu0 %v1131, 127
    %v1390 = vpop.permute.xlu0 %1389
    %1391 = vrot.lane.b32.xlu0 %v1299, 127
    %v1392 = vpop.permute.xlu0 %1391
    %1393 = vrot.lane.b32.xlu0 %v1132, 127
    %v1394 = vpop.permute.xlu0 %1393
    %1395 = vrot.lane.b32.xlu0 %v1300, 127
    %v1396 = vpop.permute.xlu0 %1395
    %1397 = vrot.lane.b32.xlu0 %v1133, 127
    %v1398 = vpop.permute.xlu0 %1397
    %1399 = vrot.lane.b32.xlu0 %v1301, 127
    %v1400 = vpop.permute.xlu0 %1399
    %1401 = vrot.lane.b32.xlu0 %v1134, 127
    %v1402 = vpop.permute.xlu0 %1401
    %1403 = vrot.lane.b32.xlu0 %v1302, 127
    %v1404 = vpop.permute.xlu0 %1403
    %1405 = vrot.lane.b32.xlu0 %v1135, 127
    %v1406 = vpop.permute.xlu0 %1405
    %1407 = vrot.lane.b32.xlu0 %v1303, 127
    %v1408 = vpop.permute.xlu0 %1407
    %1409 = vrot.lane.b32.xlu0 %v1136, 127
    %v1410 = vpop.permute.xlu0 %1409
    %1411 = vrot.lane.b32.xlu0 %v1304, 127
    %v1412 = vpop.permute.xlu0 %1411
    %1413 = vrot.lane.b32.xlu0 %v1137, 127
    %v1414 = vpop.permute.xlu0 %1413
    %1415 = vrot.lane.b32.xlu0 %v1305, 127
    %v1416 = vpop.permute.xlu0 %1415
    %1417 = vrot.lane.b32.xlu0 %v1138, 127
    %v1418 = vpop.permute.xlu0 %1417
    %1419 = vrot.lane.b32.xlu0 %v1306, 127
    %v1420 = vpop.permute.xlu0 %1419
    %1421 = vrot.lane.b32.xlu0 %v1139, 127
    %v1422 = vpop.permute.xlu0 %1421
    %1423 = vrot.lane.b32.xlu0 %v1307, 127
    %v1424 = vpop.permute.xlu0 %1423
    %1425 = vrot.lane.b32.xlu0 %v1140, 127
    %v1426 = vpop.permute.xlu0 %1425
    %1427 = vrot.lane.b32.xlu0 %v1308, 127
    %v1428 = vpop.permute.xlu0 %1427
    %v1429 = vsel %vm306, %v1334, %v1336
    %v1430 = vsel %vm306, %v1338, %v1340
    %v1431 = vsel %vm306, %v1342, %v1344
    %v1432 = vsel %vm306, %v1346, %v1348
    %v1433 = vsel %vm306, %v1350, %v1352
    %v1434 = vsel %vm306, %v1354, %v1356
    %v1435 = vsel %vm306, %v1358, %v1360
    %v1436 = vsel %vm306, %v1362, %v1364
    %v1437 = vsel %vm306, %v1366, %v1368
    %v1438 = vsel %vm306, %v1370, %v1372
    %v1439 = vsel %vm306, %v1374, %v1376
    %v1440 = vsel %vm306, %v1378, %v1380
    %v1441 = vsel %vm306, %v1382, %v1384
    %v1442 = vsel %vm306, %v1386, %v1388
    %v1443 = vsel %vm306, %v1390, %v1392
    %v1444 = vsel %vm306, %v1394, %v1396
    %v1445 = vsel %vm306, %v1398, %v1400
    %v1446 = vsel %vm306, %v1402, %v1404
    %v1447 = vsel %vm306, %v1406, %v1408
    %v1448 = vsel %vm306, %v1410, %v1412
    %v1449 = vsel %vm306, %v1414, %v1416
    %v1450 = vsel %vm306, %v1418, %v1420
    %v1451 = vsel %vm306, %v1422, %v1424
    %v1452 = vsel %vm306, %v1426, %v1428
    %v1501 = vadd.f32 %v1237, %v1429
    %v1502 = vadd.f32 %v1238, %v1336
    %v1503 = vadd.f32 %v1239, %v1430
    %v1504 = vadd.f32 %v1240, %v1340
    %v1505 = vadd.f32 %v1241, %v1431
    %v1506 = vadd.f32 %v1242, %v1344
    %v1507 = vadd.f32 %v1243, %v1432
    %v1508 = vadd.f32 %v1244, %v1348
    %v1509 = vadd.f32 %v1245, %v1433
    %v1510 = vadd.f32 %v1246, %v1352
    %v1511 = vadd.f32 %v1247, %v1434
    %v1512 = vadd.f32 %v1248, %v1356
    %v1513 = vadd.f32 %v1249, %v1435
    %v1514 = vadd.f32 %v1250, %v1360
    %v1515 = vadd.f32 %v1251, %v1436
    %v1516 = vadd.f32 %v1252, %v1364
    %v1517 = vadd.f32 %v1253, %v1437
    %v1518 = vadd.f32 %v1254, %v1368
    %v1519 = vadd.f32 %v1255, %v1438
    %v1520 = vadd.f32 %v1256, %v1372
    %v1521 = vadd.f32 %v1257, %v1439
    %v1522 = vadd.f32 %v1258, %v1376
    %v1523 = vadd.f32 %v1259, %v1440
    %v1524 = vadd.f32 %v1260, %v1380
    %v1525 = vadd.f32 %v1261, %v1441
    %v1526 = vadd.f32 %v1262, %v1384
    %v1527 = vadd.f32 %v1263, %v1442
    %v1528 = vadd.f32 %v1264, %v1388
    %v1529 = vadd.f32 %v1265, %v1443
    %v1530 = vadd.f32 %v1266, %v1392
    %v1531 = vadd.f32 %v1267, %v1444
    %v1532 = vadd.f32 %v1268, %v1396
    %v1533 = vadd.f32 %v1269, %v1445
    %v1534 = vadd.f32 %v1270, %v1400
    %v1535 = vadd.f32 %v1271, %v1446
    %v1536 = vadd.f32 %v1272, %v1404
    %v1537 = vadd.f32 %v1273, %v1447
    %v1538 = vadd.f32 %v1274, %v1408
    %v1539 = vadd.f32 %v1275, %v1448
    %v1540 = vadd.f32 %v1276, %v1412
    %v1541 = vadd.f32 %v1277, %v1449
    %v1542 = vadd.f32 %v1278, %v1416
    %v1543 = vadd.f32 %v1279, %v1450
    %v1544 = vadd.f32 %v1280, %v1420
    %v1545 = vadd.f32 %v1281, %v1451
    %v1546 = vadd.f32 %v1282, %v1424
    %v1547 = vadd.f32 %v1283, %v1452
    %v1548 = vadd.f32 %v1284, %v1428
    %v1549 = vmul.f32 %v348, %v331
    %v1550 = vmul.f32 %v349, %v332
    %v1551 = vmul.f32 %v350, %v333
    %v1552 = vmul.f32 %v351, %v334
    %v1553 = vmul.f32 %v352, %v335
    %v1554 = vmul.f32 %v353, %v336
    %v1555 = vmul.f32 %v354, %v337
    %v1556 = vmul.f32 %v355, %v338
    %v1557 = vmul.f32 %v356, %v339
    %v1558 = vmul.f32 %v357, %v340
    %v1559 = vmul.f32 %v358, %v341
    %v1560 = vmul.f32 %v359, %v342
    %v1561 = vmul.f32 %v360, %v343
    %v1562 = vmul.f32 %v361, %v344
    %v1563 = vmul.f32 %v362, %v345
    %v1564 = vmul.f32 %v363, %v346
    %v1565 = vmul.f32 %v364, %v331
    %v1566 = vmul.f32 %v365, %v332
    %v1567 = vmul.f32 %v366, %v333
    %v1568 = vmul.f32 %v367, %v334
    %v1569 = vmul.f32 %v368, %v335
    %v1570 = vmul.f32 %v369, %v336
    %v1571 = vmul.f32 %v370, %v337
    %v1572 = vmul.f32 %v371, %v338
    %v1573 = vmul.f32 %v372, %v339
    %v1574 = vmul.f32 %v373, %v340
    %v1575 = vmul.f32 %v374, %v341
    %v1576 = vmul.f32 %v375, %v342
    %v1577 = vmul.f32 %v376, %v343
    %v1578 = vmul.f32 %v377, %v344
    %v1579 = vmul.f32 %v378, %v345
    %v1580 = vmul.f32 %v379, %v346
    %v1581 = vmul.f32 %v380, %v331
    %v1582 = vmul.f32 %v381, %v332
    %v1583 = vmul.f32 %v382, %v333
    %v1584 = vmul.f32 %v383, %v334
    %v1585 = vmul.f32 %v384, %v335
    %v1586 = vmul.f32 %v385, %v336
    %v1587 = vmul.f32 %v386, %v337
    %v1588 = vmul.f32 %v387, %v338
    %v1589 = vmul.f32 %v388, %v339
    %v1590 = vmul.f32 %v389, %v340
    %v1591 = vmul.f32 %v390, %v341
    %v1592 = vmul.f32 %v391, %v342
    %v1593 = vmul.f32 %v392, %v343
    %v1594 = vmul.f32 %v393, %v344
    %v1595 = vmul.f32 %v394, %v345
    %v1596 = vmul.f32 %v395, %v346
    %v1597 = vsub.f32 %v1501, %v1549
    %v1598 = vsub.f32 %v1502, %v1550
    %v1599 = vsub.f32 %v1503, %v1551
    %v1600 = vsub.f32 %v1504, %v1552
    %v1601 = vsub.f32 %v1505, %v1553
    %v1602 = vsub.f32 %v1506, %v1554
    %v1603 = vsub.f32 %v1507, %v1555
    %v1604 = vsub.f32 %v1508, %v1556
    %v1605 = vsub.f32 %v1509, %v1557
    %v1606 = vsub.f32 %v1510, %v1558
    %v1607 = vsub.f32 %v1511, %v1559
    %v1608 = vsub.f32 %v1512, %v1560
    %v1609 = vsub.f32 %v1513, %v1561
    %v1610 = vsub.f32 %v1514, %v1562
    %v1611 = vsub.f32 %v1515, %v1563
    %v1612 = vsub.f32 %v1516, %v1564
    %v1613 = vsub.f32 %v1517, %v1565
    %v1614 = vsub.f32 %v1518, %v1566
    %v1615 = vsub.f32 %v1519, %v1567
    %v1616 = vsub.f32 %v1520, %v1568
    %v1617 = vsub.f32 %v1521, %v1569
    %v1618 = vsub.f32 %v1522, %v1570
    %v1619 = vsub.f32 %v1523, %v1571
    %v1620 = vsub.f32 %v1524, %v1572
    %v1621 = vsub.f32 %v1525, %v1573
    %v1622 = vsub.f32 %v1526, %v1574
    %v1623 = vsub.f32 %v1527, %v1575
    %v1624 = vsub.f32 %v1528, %v1576
    %v1625 = vsub.f32 %v1529, %v1577
    %v1626 = vsub.f32 %v1530, %v1578
    %v1627 = vsub.f32 %v1531, %v1579
    %v1628 = vsub.f32 %v1532, %v1580
    %v1629 = vsub.f32 %v1533, %v1581
    %v1630 = vsub.f32 %v1534, %v1582
    %v1631 = vsub.f32 %v1535, %v1583
    %v1632 = vsub.f32 %v1536, %v1584
    %v1633 = vsub.f32 %v1537, %v1585
    %v1634 = vsub.f32 %v1538, %v1586
    %v1635 = vsub.f32 %v1539, %v1587
    %v1636 = vsub.f32 %v1540, %v1588
    %v1637 = vsub.f32 %v1541, %v1589
    %v1638 = vsub.f32 %v1542, %v1590
    %v1639 = vsub.f32 %v1543, %v1591
    %v1640 = vsub.f32 %v1544, %v1592
    %v1641 = vsub.f32 %v1545, %v1593
    %v1642 = vsub.f32 %v1546, %v1594
    %v1643 = vsub.f32 %v1547, %v1595
    %v1644 = vsub.f32 %v1548, %v1596
    %v1645 = vmul.f32 %v1597, %v348
    %v1646 = vmul.f32 %v1598, %v349
    %v1647 = vmul.f32 %v1599, %v350
    %v1648 = vmul.f32 %v1600, %v351
    %v1649 = vmul.f32 %v1601, %v352
    %v1650 = vmul.f32 %v1602, %v353
    %v1651 = vmul.f32 %v1603, %v354
    %v1652 = vmul.f32 %v1604, %v355
    %v1653 = vmul.f32 %v1605, %v356
    %v1654 = vmul.f32 %v1606, %v357
    %v1655 = vmul.f32 %v1607, %v358
    %v1656 = vmul.f32 %v1608, %v359
    %v1657 = vmul.f32 %v1609, %v360
    %v1658 = vmul.f32 %v1610, %v361
    %v1659 = vmul.f32 %v1611, %v362
    %v1660 = vmul.f32 %v1612, %v363
    %v1661 = vmul.f32 %v1613, %v364
    %v1662 = vmul.f32 %v1614, %v365
    %v1663 = vmul.f32 %v1615, %v366
    %v1664 = vmul.f32 %v1616, %v367
    %v1665 = vmul.f32 %v1617, %v368
    %v1666 = vmul.f32 %v1618, %v369
    %v1667 = vmul.f32 %v1619, %v370
    %v1668 = vmul.f32 %v1620, %v371
    %v1669 = vmul.f32 %v1621, %v372
    %v1670 = vmul.f32 %v1622, %v373
    %v1671 = vmul.f32 %v1623, %v374
    %v1672 = vmul.f32 %v1624, %v375
    %v1673 = vmul.f32 %v1625, %v376
    %v1674 = vmul.f32 %v1626, %v377
    %v1675 = vmul.f32 %v1627, %v378
    %v1676 = vmul.f32 %v1628, %v379
    %v1677 = vmul.f32 %v1629, %v380
    %v1678 = vmul.f32 %v1630, %v381
    %v1679 = vmul.f32 %v1631, %v382
    %v1680 = vmul.f32 %v1632, %v383
    %v1681 = vmul.f32 %v1633, %v384
    %v1682 = vmul.f32 %v1634, %v385
    %v1683 = vmul.f32 %v1635, %v386
    %v1684 = vmul.f32 %v1636, %v387
    %v1685 = vmul.f32 %v1637, %v388
    %v1686 = vmul.f32 %v1638, %v389
    %v1687 = vmul.f32 %v1639, %v390
    %v1688 = vmul.f32 %v1640, %v391
    %v1689 = vmul.f32 %v1641, %v392
    %v1690 = vmul.f32 %v1642, %v393
    %v1691 = vmul.f32 %v1643, %v394
    %v1692 = vmul.f32 %v1644, %v395
    %vm1693 = vcmask 1047561
    %v1694 = vsel %vm1693, %v1645, 0.0
    %v1695 = vsel %vm1693, %v1661, 0.0
    %v1696 = vadd.f32 %v1694, %v1695
    %v1697 = vsel %vm1693, %v1677, 0.0
    %v1698 = vadd.f32 %v1696, %v1697
    %vm1699 = vcmask 7169
    %v1700 = vsel %vm1699, %v1646, 0.0
    %v1701 = vsel %vm1699, %v1662, 0.0
    %v1702 = vadd.f32 %v1700, %v1701
    %v1703 = vsel %vm1699, %v1678, 0.0
    %v1704 = vadd.f32 %v1702, %v1703
    %vm1705 = vcmask 1040392
    %v1706 = vsel %vm1705, %v1647, 0.0
    %v1707 = vsel %vm1705, %v1663, 0.0
    %v1708 = vadd.f32 %v1706, %v1707
    %v1709 = vsel %vm1705, %v1679, 0.0
    %v1710 = vadd.f32 %v1708, %v1709
    %vm1711 = vcmask 0
    %v1712 = vsel %vm1711, %v1648, 0.0
    %v1713 = vsel %vm1711, %v1664, 0.0
    %v1714 = vadd.f32 %v1712, %v1713
    %v1715 = vsel %vm1711, %v1680, 0.0
    %v1716 = vadd.f32 %v1714, %v1715
    %v1717 = vsel %vm1693, %v1649, 0.0
    %v1718 = vsel %vm1693, %v1665, 0.0
    %v1719 = vadd.f32 %v1717, %v1718
    %v1720 = vsel %vm1693, %v1681, 0.0
    %v1721 = vadd.f32 %v1719, %v1720
    %v1722 = vsel %vm1699, %v1650, 0.0
    %v1723 = vsel %vm1699, %v1666, 0.0
    %v1724 = vadd.f32 %v1722, %v1723
    %v1725 = vsel %vm1699, %v1682, 0.0
    %v1726 = vadd.f32 %v1724, %v1725
    %v1727 = vsel %vm1705, %v1651, 0.0
    %v1728 = vsel %vm1705, %v1667, 0.0
    %v1729 = vadd.f32 %v1727, %v1728
    %v1730 = vsel %vm1705, %v1683, 0.0
    %v1731 = vadd.f32 %v1729, %v1730
    %v1732 = vsel %vm1711, %v1652, 0.0
    %v1733 = vsel %vm1711, %v1668, 0.0
    %v1734 = vadd.f32 %v1732, %v1733
    %v1735 = vsel %vm1711, %v1684, 0.0
    %v1736 = vadd.f32 %v1734, %v1735
    %v1737 = vsel %vm1693, %v1653, 0.0
    %v1738 = vsel %vm1693, %v1669, 0.0
    %v1739 = vadd.f32 %v1737, %v1738
    %v1740 = vsel %vm1693, %v1685, 0.0
    %v1741 = vadd.f32 %v1739, %v1740
    %v1742 = vsel %vm1699, %v1654, 0.0
    %v1743 = vsel %vm1699, %v1670, 0.0
    %v1744 = vadd.f32 %v1742, %v1743
    %v1745 = vsel %vm1699, %v1686, 0.0
    %v1746 = vadd.f32 %v1744, %v1745
    %v1747 = vsel %vm1705, %v1655, 0.0
    %v1748 = vsel %vm1705, %v1671, 0.0
    %v1749 = vadd.f32 %v1747, %v1748
    %v1750 = vsel %vm1705, %v1687, 0.0
    %v1751 = vadd.f32 %v1749, %v1750
    %v1752 = vsel %vm1711, %v1656, 0.0
    %v1753 = vsel %vm1711, %v1672, 0.0
    %v1754 = vadd.f32 %v1752, %v1753
    %v1755 = vsel %vm1711, %v1688, 0.0
    %v1756 = vadd.f32 %v1754, %v1755
    %v1757 = vsel %vm1693, %v1657, 0.0
    %v1758 = vsel %vm1693, %v1673, 0.0
    %v1759 = vadd.f32 %v1757, %v1758
    %v1760 = vsel %vm1693, %v1689, 0.0
    %v1761 = vadd.f32 %v1759, %v1760
    %v1762 = vsel %vm1699, %v1658, 0.0
    %v1763 = vsel %vm1699, %v1674, 0.0
    %v1764 = vadd.f32 %v1762, %v1763
    %v1765 = vsel %vm1699, %v1690, 0.0
    %v1766 = vadd.f32 %v1764, %v1765
    %v1767 = vsel %vm1705, %v1659, 0.0
    %v1768 = vsel %vm1705, %v1675, 0.0
    %v1769 = vadd.f32 %v1767, %v1768
    %v1770 = vsel %vm1705, %v1691, 0.0
    %v1771 = vadd.f32 %v1769, %v1770
    %v1772 = vsel %vm1711, %v1660, 0.0
    %v1773 = vsel %vm1711, %v1676, 0.0
    %v1774 = vadd.f32 %v1772, %v1773
    %v1775 = vsel %vm1711, %v1692, 0.0
    %v1776 = vadd.f32 %v1774, %v1775
    %v1777 = vld [vmem:[%s2] sm:$0xff]
    %v1778 = vld [vmem:[%s2 + $0x8] sm:$0xff]
    %v1779 = vld [vmem:[%s2 + $0x10] sm:$0xff]
    %v1780 = vld [vmem:[%s2 + $0x18] sm:$0xff]
    %v1781 = vmul.f32 %v1777, -1e+18
    %v1782 = vmul.f32 %v1778, -1e+18
    %v1783 = vmul.f32 %v1779, -1e+18
    %v1784 = vmul.f32 %v1780, -1e+18
    %v1789 = vrot.slane %v1781, 7
    %v1790 = vrot.slane %v1782, 7
    %v1791 = vrot.slane %v1783, 7
    %v1792 = vrot.slane %v1784, 7
    %1793 = vrot.lane.b32.xlu0 %v1789, 1
    %v1794 = vpop.permute.xlu0 %1793
    %1795 = vrot.lane.b32.xlu0 %v1790, 1
    %v1796 = vpop.permute.xlu0 %1795
    %1797 = vrot.lane.b32.xlu0 %v1791, 1
    %v1798 = vpop.permute.xlu0 %1797
    %1799 = vrot.lane.b32.xlu0 %v1792, 1
    %v1800 = vpop.permute.xlu0 %1799
    %v1805 = vmul.f32 %v1698, %v1794
    %v1806 = vmul.f32 %v1704, %v1794
    %v1807 = vmul.f32 %v1710, %v1794
    %v1808 = vmul.f32 %v1716, %v1794
    %v1809 = vmul.f32 %v1721, %v1796
    %v1810 = vmul.f32 %v1726, %v1796
    %v1811 = vmul.f32 %v1731, %v1796
    %v1812 = vmul.f32 %v1736, %v1796
    %v1813 = vmul.f32 %v1741, %v1798
    %v1814 = vmul.f32 %v1746, %v1798
    %v1815 = vmul.f32 %v1751, %v1798
    %v1816 = vmul.f32 %v1756, %v1798
    %v1817 = vmul.f32 %v1761, %v1800
    %v1818 = vmul.f32 %v1766, %v1800
    %v1819 = vmul.f32 %v1771, %v1800
    %v1820 = vmul.f32 %v1776, %v1800
    %1837 = vrot.lane.b32.xlu0 %v1805, 127
    %v1838 = vpop.permute.xlu0 %1837
    %1839 = vrot.lane.b32.xlu0 %v1806, 127
    %v1840 = vpop.permute.xlu0 %1839
    %1841 = vrot.lane.b32.xlu0 %v1807, 127
    %v1842 = vpop.permute.xlu0 %1841
    %1843 = vrot.lane.b32.xlu0 %v1808, 127
    %v1844 = vpop.permute.xlu0 %1843
    %1845 = vrot.lane.b32.xlu0 %v1809, 127
    %v1846 = vpop.permute.xlu0 %1845
    %1847 = vrot.lane.b32.xlu0 %v1810, 127
    %v1848 = vpop.permute.xlu0 %1847
    %1849 = vrot.lane.b32.xlu0 %v1811, 127
    %v1850 = vpop.permute.xlu0 %1849
    %1851 = vrot.lane.b32.xlu0 %v1812, 127
    %v1852 = vpop.permute.xlu0 %1851
    %1853 = vrot.lane.b32.xlu0 %v1813, 127
    %v1854 = vpop.permute.xlu0 %1853
    %1855 = vrot.lane.b32.xlu0 %v1814, 127
    %v1856 = vpop.permute.xlu0 %1855
    %1857 = vrot.lane.b32.xlu0 %v1815, 127
    %v1858 = vpop.permute.xlu0 %1857
    %1859 = vrot.lane.b32.xlu0 %v1816, 127
    %v1860 = vpop.permute.xlu0 %1859
    %1861 = vrot.lane.b32.xlu0 %v1817, 127
    %v1862 = vpop.permute.xlu0 %1861
    %1863 = vrot.lane.b32.xlu0 %v1818, 127
    %v1864 = vpop.permute.xlu0 %1863
    %1865 = vrot.lane.b32.xlu0 %v1819, 127
    %v1866 = vpop.permute.xlu0 %1865
    %1867 = vrot.lane.b32.xlu0 %v1820, 127
    %v1868 = vpop.permute.xlu0 %1867
    %v1869 = vsel %vm306, %v1838, %v1840
    %v1870 = vsel %vm306, %v1842, %v1844
    %v1871 = vsel %vm306, %v1846, %v1848
    %v1872 = vsel %vm306, %v1850, %v1852
    %v1873 = vsel %vm306, %v1854, %v1856
    %v1874 = vsel %vm306, %v1858, %v1860
    %v1875 = vsel %vm306, %v1862, %v1864
    %v1876 = vsel %vm306, %v1866, %v1868
    %1885 = vst [vmem:[#allocation2 - $0x1] sm:$0xfe] %v1869
    %1886 = vst [vmem:[#allocation2 + $0x7] sm:$0x1] %v1870
    %1887 = vst [vmem:[#allocation2 + $0x7] sm:$0xfe] %v1871
    %1888 = vst [vmem:[#allocation2 + $0xf] sm:$0x1] %v1872
    %1889 = vst [vmem:[#allocation2 + $0xf] sm:$0xfe] %v1873
    %1890 = vst [vmem:[#allocation2 + $0x17] sm:$0x1] %v1874
    %1891 = vst [vmem:[#allocation2 + $0x17] sm:$0xfe] %v1875
    %1892 = vst [vmem:[#allocation2 + $0x1f] sm:$0x1] %v1876
    // Predicated region
    $region14: #{tpu_custom_call.1} parent=1 // pred_check
      _
    $region15: #{tpu_custom_call.1} parent=1 // pred_check_branch
      %1894 = sbr.rel (0) target = $region17
    $region16: #{tpu_custom_call.1} parent=1 // pred_region
      %1896 = vsyncadd [#allocation3], 0
      %s1897 = sshll.u32 [#allocation2], 4
      %s1898 = int_to_ptr.vmem [resolvable:$true] %s1897
      %s1899 = sshll.u32 %s3, 4
      %s1900 = int_to_ptr.hbm [resolvable:$true] %s1899
      %1905 = dma.vmem_to_hbm [thread:$0]  %s1898, 512, %s1900, [#allocation3], 128, 128, 8
    $region17: #{tpu_custom_call.1} parent=1 // pred_fallthru
      _
    // Predicated region
    $region18: #{tpu_custom_call.1} parent=1 // pred_check
      _
    $region19: #{tpu_custom_call.1} parent=1 // pred_check_branch
      %1907 = sbr.rel (0) target = $region21
    $region20: #{tpu_custom_call.1} parent=1 // pred_region
      %1909 = dma.done [#allocation3], 512
    $region21: #{tpu_custom_call.1} parent=1 // pred_fallthru
      _
    %1910 = vsyncpa [#allocation3], 1

</llo_original>
